<compile_context>
chip_gen: v6e
topology: v6e:2x2x1
jax: 0.10.0
libtpu: 0.0.40
codegen_flags: <defaults>
</compile_context>

<pallas_src>
import numpy as np
import jax
import jax.numpy as jnp
from jax import lax
from jax.experimental import pallas as pl
from jax.experimental.pallas import tpu as pltpu

COS_EPS = 1e-6  # nn.CosineSimilarity(dim=1, eps=1e-6); clamp applied per norm.


# ---------------------------------------------------------------------------
# Pallas kernel
# ---------------------------------------------------------------------------
def _make_loss_kernel(n_total, inv_temp, denom_scale, use_bf16):
    """Gram accumulation over F tiles + fused contrastive-loss finalize."""

    def kernel(x_ref, mean_ref, sel_ref, mask_ref, ra_ref, rb_ref, ms_ref,
               out_ref, acc_ref):
        k = pl.program_id(0)

        @pl.when(k == 0)
        def _init():
            acc_ref[...] = jnp.zeros_like(acc_ref)

        # Demean: select the per-row dataset mean via a tiny one-hot matmul
        # (MXU); avoids materializing [N, F] gathered means in HBM.
        m_sel = jnp.dot(sel_ref[...], mean_ref[...],
                        preferred_element_type=jnp.float32)            # [N, TF]
        d = x_ref[...] - m_sel                                          # [N, TF]
        if use_bf16:
            d = d.astype(jnp.bfloat16)  # MXU-only cast; accumulation stays f32.
        # Gram accumulate, contracting the last axis of both operands so the
        # MXU consumes the tiles directly (no d.T XLU transpose).
        acc_ref[...] += lax.dot_general(
            d, d, (((1,), (1,)), ((), ())),
            preferred_element_type=jnp.float32)

        @pl.when(k == pl.num_programs(0) - 1)
        def _finalize():
            g = acc_ref[...]                                            # [N, N]
            rows = lax.broadcasted_iota(jnp.int32, (n_total, n_total), 0)
            cols = lax.broadcasted_iota(jnp.int32, (n_total, n_total), 1)
            gd = jnp.where(rows == cols, g, 0.0)
            # Row norms are exactly the Gram diagonal.
            diag_col = jnp.sum(gd, axis=1, keepdims=True)               # [N, 1]
            diag_row = jnp.sum(gd, axis=0, keepdims=True)               # [1, N]
            # 1 / max(||x||, eps) == rsqrt(max(||x||^2, eps^2))   (EUP, no vdiv)
            inv_col = lax.rsqrt(jnp.maximum(diag_col, COS_EPS * COS_EPS))
            inv_row = lax.rsqrt(jnp.maximum(diag_row, COS_EPS * COS_EPS))
            st = g * inv_col * inv_row * inv_temp                       # S/temp
            e = jnp.exp(st)

            # Denominator sums for every (row, positive-index mask) combo:
            #   dsum[i, m] = sum_{j in den(m)} exp(S[i, j] / temp)
            dsum = lax.dot_general(e, mask_ref[...],
                                   (((1,), (1,)), ((), ())),
                                   preferred_element_type=jnp.float32)  # [N, M]

            ra = ra_ref[...]                                            # [K, N]
            rb = rb_ref[...]                                            # [K, N]
            ms = ms_ref[...]                                            # [K, M]
            st_a = lax.dot_general(ra, st, (((1,), (0,)), ((), ())),
                                   preferred_element_type=jnp.float32)  # [K, N]
            s_ij = jnp.sum(st_a * rb, axis=1, keepdims=True)            # [K, 1]
            d_a = jnp.sum(
                lax.dot_general(ra, dsum, (((1,), (0,)), ((), ())),
                                preferred_element_type=jnp.float32) * ms,
                axis=1, keepdims=True)                                  # [K, 1]
            d_b = jnp.sum(
                lax.dot_general(rb, dsum, (((1,), (0,)), ((), ())),
                                preferred_element_type=jnp.float32) * ms,
                axis=1, keepdims=True)                                  # [K, 1]
            e_ij = jnp.exp(s_ij)
            # per-pair symmetric loss: log(e+D_i) + log(e+D_j) - 2*S_ij/temp
            terms = jnp.log(e_ij + d_a) + jnp.log(e_ij + d_b) - 2.0 * s_ij
            total = jnp.sum(terms) * denom_scale
            # Lane-dense scalar write-out; wrapper reads element [0, 0].
            out_ref[...] = jnp.zeros((8, 128), jnp.float32) + total

    return kernel


# ---------------------------------------------------------------------------
# Module-equivalent wrapper
# ---------------------------------------------------------------------------
class DemeanedGlobalLossD:
    def __init__(self, config_encoder, within_dataset=False,
                 use_bf16_matmul=False, f_block=512):
        self.n_parts = config_encoder['n_parts']
        self.n_datasets = config_encoder['n_datasets']
        self.n_volumes = config_encoder['n_volumes']
        self.n_transforms = config_encoder['n_transforms']
        self.batch_size = self.n_parts * self.n_datasets * self.n_volumes
        self.weight_loss = config_encoder['weight_loss']
        self.temp_fac = config_encoder['temp_fac']
        self.within_dataset = within_dataset
        self.use_bf16_matmul = use_bf16_matmul
        self.f_block = f_block
        self.n_total = self.batch_size * (self.n_transforms + 1)
        self._build_static_index_sets()

    # Static, config-only precompute (runs once on host at construction).
    def _build_static_index_sets(self):
        n_parts, n_datasets = self.n_parts, self.n_datasets
        bs, T, n_total = self.batch_size, self.n_transforms, self.n_total
        pd = n_parts * n_datasets

        # one-hot dataset selector (sublane-padded so the tiny matmul has K>=8)
        nd_pad = int(np.ceil(max(n_datasets, 8) / 8)) * 8
        sel = np.zeros((n_total, nd_pad), dtype=np.float32)
        for i in range(n_total):
            sel[i, (i // n_parts) % n_datasets] = 1.0

        masks = np.zeros((bs, n_total), dtype=np.float32)
        rows_a, rows_b, mask_id = [], [], []
        for pos in range(bs):
            i1, i2 = pos, bs + pos
            i3 = (pos + pd) % n_total
            i4 = (bs + pos + pd) % n_total
            pairs = [(i1, i2), (i3, i4), (i1, i3), (i2, i4)]
            if T == 2:
                i5 = 2 * bs + pos
                i6 = (2 * bs + pos + pd) % n_total
                pairs += [(i5, i6), (i2, i5), (i4, i6)]
            rem = i1 % pd
            ind_l = list(range(rem, n_total, pd))
            if self.within_dataset:
                for i in range(n_total):
                    if (i // n_parts) % n_datasets != (i1 // n_parts) % n_datasets:
                        ind_l.append(i)
            den = np.delete(np.arange(n_total, dtype=np.int64), ind_l)
            masks[pos, den] = 1.0
            for (a, b) in pairs:
                rows_a.append(a)
                rows_b.append(b)
                mask_id.append(pos)

        k_terms = len(rows_a)
        ra = np.zeros((k_terms, n_total), dtype=np.float32)
        rb = np.zeros((k_terms, n_total), dtype=np.float32)
        ms = np.zeros((k_terms, bs), dtype=np.float32)
        ra[np.arange(k_terms), rows_a] = 1.0
        rb[np.arange(k_terms), rows_b] = 1.0
        ms[np.arange(k_terms), mask_id] = 1.0

        self._nd_pad = nd_pad
        self._n_terms = k_terms
        self._sel = jnp.asarray(sel)
        self._masks = jnp.asarray(masks)
        self._ra = jnp.asarray(ra)
        self._rb = jnp.asarray(rb)
        self._ms = jnp.asarray(ms)

    def forward(self, reg_pred, mean_representations):
        n_total = self.n_total
        assert reg_pred.shape[0] == n_total
        feat = int(np.prod(reg_pred.shape[1:]))
        x = jnp.asarray(reg_pred, dtype=jnp.float32).reshape(n_total, feat)
        m = jnp.asarray(mean_representations, dtype=jnp.float32).reshape(
            self.n_datasets, feat)

        # F tile: multiple of 128, zero-pad F up to a multiple of it.  Zero
        # padding of x AND the means contributes nothing to the Gram matrix.
        tf = max(128, (int(self.f_block) // 128) * 128)
        feat128 = ((feat + 127) // 128) * 128
        if feat128 <= tf:
            tf = feat128
        fp = ((feat + tf - 1) // tf) * tf
        if fp != feat:
            x = jnp.pad(x, ((0, 0), (0, fp - feat)))
            m = jnp.pad(m, ((0, 0), (0, fp - feat)))
        if self._nd_pad != self.n_datasets:
            m = jnp.pad(m, ((0, self._nd_pad - self.n_datasets), (0, 0)))

        n_steps = fp // tf
        nd_pad, n_terms = self._nd_pad, self._n_terms
        n_masks = self.batch_size
        kernel = _make_loss_kernel(
            n_total,
            inv_temp=1.0 / float(self.temp_fac),
            denom_scale=1.0 / float(self.n_transforms * 3 * self.batch_size),
            use_bf16=self.use_bf16_matmul)

        out = pl.pallas_call(
            kernel,
            out_shape=jax.ShapeDtypeStruct((8, 128), jnp.float32),
            grid_spec=pltpu.PrefetchScalarGridSpec(
                num_scalar_prefetch=0,
                grid=(n_steps,),
                in_specs=[
                    pl.BlockSpec((n_total, tf), lambda k: (0, k)),     # x
                    pl.BlockSpec((nd_pad, tf), lambda k: (0, k)),      # means
                    pl.BlockSpec((n_total, nd_pad), lambda k: (0, 0)),  # sel
                    pl.BlockSpec((n_masks, n_total), lambda k: (0, 0)),  # masks
                    pl.BlockSpec((n_terms, n_total), lambda k: (0, 0)),  # row a
                    pl.BlockSpec((n_terms, n_total), lambda k: (0, 0)),  # row b
                    pl.BlockSpec((n_terms, n_masks), lambda k: (0, 0)),  # mask sel
                ],
                out_specs=pl.BlockSpec((8, 128), lambda k: (0, 0)),
                scratch_shapes=[pltpu.VMEM((n_total, n_total), jnp.float32)],
            ),
            compiler_params=pltpu.CompilerParams(
                dimension_semantics=("arbitrary",)),
        )(x, m, self._sel, self._masks, self._ra, self._rb, self._ms)
        return out[0, 0]

    __call__ = forward


# ---------------------------------------------------------------------------
# Pure NumPy (float64) reference mirroring the PyTorch module.
# ---------------------------------------------------------------------------
def _reference_loss(cfg, reg_pred, mean_representations, within_dataset=False):
    n_parts, n_datasets = cfg['n_parts'], cfg['n_datasets']
    bs = n_parts * n_datasets * cfg['n_volumes']
    T = cfg['n_transforms']
    temp = cfg['temp_fac']
    n_total = bs * (T + 1)
    pd = n_parts * n_datasets
    feat = int(np.prod(reg_pred.shape[1:]))
    x = np.asarray(reg_pred, dtype=np.float64).reshape(n_total, feat)
    ds_idx = np.array([(i // n_parts) % n_datasets for i in range(n_total)])
    m = np.asarray(mean_representations, dtype=np.float64).reshape(
        n_datasets, feat)[ds_idx]

    def cos(a, b):
        na = np.maximum(np.linalg.norm(a, axis=-1), COS_EPS)
        nb = np.maximum(np.linalg.norm(b, axis=-1), COS_EPS)
        return np.sum(a * b, axis=-1) / (na * nb)

    def sym(i, j, den):
        di, dj, dd = x[i] - m[i], x[j] - m[j], x[den] - m[den]
        s_num = cos(di[None], dj[None])[0] / temp
        l1 = -np.log(np.exp(s_num) /
                     (np.exp(s_num) + np.sum(np.exp(cos(di[None], dd) / temp))))
        l2 = -np.log(np.exp(s_num) /
                     (np.exp(s_num) + np.sum(np.exp(cos(dj[None], dd) / temp))))
        return l1 + l2

    total = 0.0
    for pos in range(bs):
        i1, i2 = pos, bs + pos
        i3 = (pos + pd) % n_total
        i4 = (bs + pos + pd) % n_total
        rem = i1 % pd
        ind_l = list(range(rem, n_total, pd))
        if within_dataset:
            for i in range(n_total):
                if (i // n_parts) % n_datasets != (i1 // n_parts) % n_datasets:
                    ind_l.append(i)
        den = np.delete(np.arange(n_total), ind_l)
        total += sym(i1, i2, den) + sym(i3, i4, den)
        total += sym(i1, i3, den) + sym(i2, i4, den)
        if T == 2:
            i5 = 2 * bs + pos
            i6 = (2 * bs + pos + pd) % n_total
            total += sym(i5, i6, den) + sym(i2, i5, den) + sym(i4, i6, den)
    return total / (T * 3 * bs)


# ---------------------------------------------------------------------------
# Self-test
# ---------------------------------------------------------------------------
if __name__ == "__main__":
    C, H, W = 4, 16, 16
    key = jax.random.PRNGKey(0)

    test_cases = [
        # (config, within_dataset)
        (dict(n_parts=2, n_datasets=2, n_volumes=2, n_transforms=1,
              weight_loss=1.0, temp_fac=0.1), False),
        (dict(n_parts=2, n_datasets=2, n_volumes=2, n_transforms=1,
              weight_loss=1.0, temp_fac=0.1), True),
        (dict(n_parts=2, n_datasets=2, n_volumes=1, n_transforms=2,
              weight_loss=1.0, temp_fac=0.1), False),
    ]

    for idx, (config, within) in enumerate(test_cases):
        bs = config['n_parts'] * config['n_datasets'] * config['n_volumes']
        n_total = bs * (config['n_transforms'] + 1)
        key, k1, k2 = jax.random.split(key, 3)
        reg_pred = jax.random.normal(k1, (n_total, C, H, W), dtype=jnp.float32)
        mean_representations = jax.random.normal(
            k2, (config['n_datasets'], C, H, W), dtype=jnp.float32) * 0.1

        loss_mod = DemeanedGlobalLossD(config, within_dataset=within)
        out = jax.block_until_ready(loss_mod(reg_pred, mean_representations))

        ref = _reference_loss(config, np.asarray(reg_pred),
                              np.asarray(mean_representations),
                              within_dataset=within)
        assert np.isfinite(float(out)), (idx, float(out))
        assert abs(float(out) - ref) <= 1e-3 * max(1.0, abs(ref)), \
            (idx, float(out), ref)

    print("KERNEL_OK")
</pallas_src>

<mosaic_0001>
module attributes {stable_mosaic.version = 11 : i64} {
  func.func @kernel(%arg0: i32, %arg1: memref<16x512xf32, #tpu.memory_space<vmem>>, %arg2: memref<8x512xf32, #tpu.memory_space<vmem>>, %arg3: memref<16x8xf32, #tpu.memory_space<vmem>>, %arg4: memref<8x16xf32, #tpu.memory_space<vmem>>, %arg5: memref<32x16xf32, #tpu.memory_space<vmem>>, %arg6: memref<32x16xf32, #tpu.memory_space<vmem>>, %arg7: memref<32x8xf32, #tpu.memory_space<vmem>>, %arg8: memref<8x128xf32, #tpu.memory_space<vmem>>, %arg9: memref<16x16xf32, #tpu.memory_space<vmem>>) attributes {dimension_semantics = [#tpu.dimension_semantics<arbitrary>], iteration_bounds = array<i64: 2>, scalar_prefetch = 0 : i64, scratch_operands = 1 : i64, tpu.core_type = #tpu.core_type<tc>, window_params = [{transform_indices = @transform_0, window_bounds = array<i64: 16, 512>}, {transform_indices = @transform_1, window_bounds = array<i64: 8, 512>}, {pipeline_mode = #tpu.pipeline_mode<synchronous>, transform_indices = @transform_2, window_bounds = array<i64: 16, 8>}, {pipeline_mode = #tpu.pipeline_mode<synchronous>, transform_indices = @transform_3, window_bounds = array<i64: 8, 16>}, {pipeline_mode = #tpu.pipeline_mode<synchronous>, transform_indices = @transform_4, window_bounds = array<i64: 32, 16>}, {pipeline_mode = #tpu.pipeline_mode<synchronous>, transform_indices = @transform_5, window_bounds = array<i64: 32, 16>}, {pipeline_mode = #tpu.pipeline_mode<synchronous>, transform_indices = @transform_6, window_bounds = array<i64: 32, 8>}, {pipeline_mode = #tpu.pipeline_mode<synchronous>, transform_indices = @transform_7, window_bounds = array<i64: 8, 128>}]} {
    %c0_i32 = arith.constant 0 : i32
    %0 = arith.cmpi eq, %arg0, %c0_i32 : i32
    %1 = arith.extui %0 : i1 to i32
    %c0_i32_0 = arith.constant 0 : i32
    %2 = arith.cmpi ne, %1, %c0_i32_0 : i32
    scf.if %2 {
      %cst_12 = arith.constant 0.000000e+00 : f32
      %15 = vector.broadcast %cst_12 : f32 to vector<16x16xf32>
      %c0_13 = arith.constant 0 : index
      %c0_14 = arith.constant 0 : index
      %16 = vector.load %arg9[%c0_13, %c0_14] : memref<16x16xf32, #tpu.memory_space<vmem>>, vector<16x16xf32>
      tpu.vector_store %arg9[%c0_13, %c0_14], %15 {strides = array<i32>} : memref<16x16xf32, #tpu.memory_space<vmem>>, vector<16x16xf32>,
    } else {
    }
    %c0 = arith.constant 0 : index
    %c0_1 = arith.constant 0 : index
    %3 = vector.load %arg3[%c0, %c0_1] : memref<16x8xf32, #tpu.memory_space<vmem>>, vector<16x8xf32>
    %c0_2 = arith.constant 0 : index
    %c0_3 = arith.constant 0 : index
    %4 = vector.load %arg2[%c0_2, %c0_3] : memref<8x512xf32, #tpu.memory_space<vmem>>, vector<8x512xf32>
    %cst = arith.constant dense<0.000000e+00> : vector<16x512xf32>
    %5 = tpu.matmul %3, %4, %cst {dimension_numbers = #tpu.dot_dimension_numbers<[1], [0], [0], [1], [0, 0, 1, 1], [], []>} : vector<16x8xf32>, vector<8x512xf32>, vector<16x512xf32> -> vector<16x512xf32>
    %c0_4 = arith.constant 0 : index
    %c0_5 = arith.constant 0 : index
    %6 = vector.load %arg1[%c0_4, %c0_5] : memref<16x512xf32, #tpu.memory_space<vmem>>, vector<16x512xf32>
    %7 = arith.subf %6, %5 : vector<16x512xf32>
    %c0_6 = arith.constant 0 : index
    %c0_7 = arith.constant 0 : index
    %8 = vector.load %arg9[%c0_6, %c0_7] : memref<16x16xf32, #tpu.memory_space<vmem>>, vector<16x16xf32>
    %cst_8 = arith.constant dense<0.000000e+00> : vector<16x16xf32>
    %9 = tpu.matmul %7, %7, %cst_8 {dimension_numbers = #tpu.dot_dimension_numbers<[1], [1], [0], [0], [0, 0, 1, 0], [], []>} : vector<16x512xf32>, vector<16x512xf32>, vector<16x16xf32> -> vector<16x16xf32>
    %10 = arith.addf %8, %9 : vector<16x16xf32>
    %c0_9 = arith.constant 0 : index
    %c0_10 = arith.constant 0 : index
    %11 = vector.load %arg9[%c0_9, %c0_10] : memref<16x16xf32, #tpu.memory_space<vmem>>, vector<16x16xf32>
    tpu.vector_store %arg9[%c0_9, %c0_10], %10 {strides = array<i32>} : memref<16x16xf32, #tpu.memory_space<vmem>>, vector<16x16xf32>,
    %c1_i32 = arith.constant 1 : i32
    %12 = arith.cmpi eq, %arg0, %c1_i32 : i32
    %13 = arith.extui %12 : i1 to i32
    %c0_i32_11 = arith.constant 0 : i32
    %14 = arith.cmpi ne, %13, %c0_i32_11 : i32
    scf.if %14 {
      %c0_12 = arith.constant 0 : index
      %c0_13 = arith.constant 0 : index
      %15 = vector.load %arg9[%c0_12, %c0_13] : memref<16x16xf32, #tpu.memory_space<vmem>>, vector<16x16xf32>
      %16 = tpu.iota {dimensions = array<i32: 0>} : vector<16x16xi32>
      %17 = tpu.iota {dimensions = array<i32: 1>} : vector<16x16xi32>
      %18 = arith.cmpi eq, %16, %17 : vector<16x16xi32>
      %cst_14 = arith.constant 0.000000e+00 : f32
      %19 = vector.broadcast %cst_14 : f32 to vector<16x16xf32>
      %20 = arith.select %18, %15, %19 : vector<16x16xi1>, vector<16x16xf32>
      %cst_15 = arith.constant dense<0.000000e+00> : vector<16xf32>
      %21 = vector.multi_reduction <add>, %20, %cst_15 [1] : vector<16x16xf32> to vector<16xf32>
      %22 = vector.shape_cast %21 : vector<16xf32> to vector<16x1xf32>
      %cst_16 = arith.constant dense<0.000000e+00> : vector<16xf32>
      %23 = vector.multi_reduction <add>, %20, %cst_16 [0] : vector<16x16xf32> to vector<16xf32>
      %24 = vector.shape_cast %23 : vector<16xf32> to vector<1x16xf32>
      %cst_17 = arith.constant 9.99999996E-13 : f32
      %25 = vector.broadcast %cst_17 : f32 to vector<16x1xf32>
      %26 = arith.maximumf %22, %25 : vector<16x1xf32>
      %27 = math.rsqrt %26 : vector<16x1xf32>
      %cst_18 = arith.constant 9.99999996E-13 : f32
      %28 = vector.broadcast %cst_18 : f32 to vector<1x16xf32>
      %29 = arith.maximumf %24, %28 : vector<1x16xf32>
      %30 = math.rsqrt %29 : vector<1x16xf32>
      %31 = vector.broadcast %27 : vector<16x1xf32> to vector<16x16xf32>
      %32 = arith.mulf %15, %31 : vector<16x16xf32>
      %33 = vector.broadcast %30 : vector<1x16xf32> to vector<16x16xf32>
      %34 = arith.mulf %32, %33 : vector<16x16xf32>
      %cst_19 = arith.constant 1.000000e+01 : f32
      %35 = vector.broadcast %cst_19 : f32 to vector<16x16xf32>
      %36 = arith.mulf %34, %35 : vector<16x16xf32>
      %37 = math.exp %36 : vector<16x16xf32>
      %c0_20 = arith.constant 0 : index
      %c0_21 = arith.constant 0 : index
      %38 = vector.load %arg4[%c0_20, %c0_21] : memref<8x16xf32, #tpu.memory_space<vmem>>, vector<8x16xf32>
      %cst_22 = arith.constant dense<0.000000e+00> : vector<16x8xf32>
      %39 = tpu.matmul %37, %38, %cst_22 {dimension_numbers = #tpu.dot_dimension_numbers<[1], [1], [0], [0], [0, 0, 1, 0], [], []>} : vector<16x16xf32>, vector<8x16xf32>, vector<16x8xf32> -> vector<16x8xf32>
      %c0_23 = arith.constant 0 : index
      %c0_24 = arith.constant 0 : index
      %40 = vector.load %arg5[%c0_23, %c0_24] : memref<32x16xf32, #tpu.memory_space<vmem>>, vector<32x16xf32>
      %c0_25 = arith.constant 0 : index
      %c0_26 = arith.constant 0 : index
      %41 = vector.load %arg6[%c0_25, %c0_26] : memref<32x16xf32, #tpu.memory_space<vmem>>, vector<32x16xf32>
      %c0_27 = arith.constant 0 : index
      %c0_28 = arith.constant 0 : index
      %42 = vector.load %arg7[%c0_27, %c0_28] : memref<32x8xf32, #tpu.memory_space<vmem>>, vector<32x8xf32>
      %cst_29 = arith.constant dense<0.000000e+00> : vector<32x16xf32>
      %43 = tpu.matmul %40, %36, %cst_29 {dimension_numbers = #tpu.dot_dimension_numbers<[1], [0], [0], [1], [0, 0, 1, 1], [], []>} : vector<32x16xf32>, vector<16x16xf32>, vector<32x16xf32> -> vector<32x16xf32>
      %44 = arith.mulf %43, %41 : vector<32x16xf32>
      %cst_30 = arith.constant dense<0.000000e+00> : vector<32xf32>
      %45 = vector.multi_reduction <add>, %44, %cst_30 [1] : vector<32x16xf32> to vector<32xf32>
      %46 = vector.shape_cast %45 : vector<32xf32> to vector<32x1xf32>
      %cst_31 = arith.constant dense<0.000000e+00> : vector<32x8xf32>
      %47 = tpu.matmul %40, %39, %cst_31 {dimension_numbers = #tpu.dot_dimension_numbers<[1], [0], [0], [1], [0, 0, 1, 1], [], []>} : vector<32x16xf32>, vector<16x8xf32>, vector<32x8xf32> -> vector<32x8xf32>
      %48 = arith.mulf %47, %42 : vector<32x8xf32>
      %cst_32 = arith.constant dense<0.000000e+00> : vector<32xf32>
      %49 = vector.multi_reduction <add>, %48, %cst_32 [1] : vector<32x8xf32> to vector<32xf32>
      %50 = vector.shape_cast %49 : vector<32xf32> to vector<32x1xf32>
      %cst_33 = arith.constant dense<0.000000e+00> : vector<32x8xf32>
      %51 = tpu.matmul %41, %39, %cst_33 {dimension_numbers = #tpu.dot_dimension_numbers<[1], [0], [0], [1], [0, 0, 1, 1], [], []>} : vector<32x16xf32>, vector<16x8xf32>, vector<32x8xf32> -> vector<32x8xf32>
      %52 = arith.mulf %51, %42 : vector<32x8xf32>
      %cst_34 = arith.constant dense<0.000000e+00> : vector<32xf32>
      %53 = vector.multi_reduction <add>, %52, %cst_34 [1] : vector<32x8xf32> to vector<32xf32>
      %54 = vector.shape_cast %53 : vector<32xf32> to vector<32x1xf32>
      %55 = math.exp %46 : vector<32x1xf32>
      %56 = arith.addf %55, %50 : vector<32x1xf32>
      %57 = math.log %56 : vector<32x1xf32>
      %58 = arith.addf %55, %54 : vector<32x1xf32>
      %59 = math.log %58 : vector<32x1xf32>
      %60 = arith.addf %57, %59 : vector<32x1xf32>
      %cst_35 = arith.constant 2.000000e+00 : f32
      %61 = vector.broadcast %cst_35 : f32 to vector<32x1xf32>
      %62 = arith.mulf %61, %46 : vector<32x1xf32>
      %63 = arith.subf %60, %62 : vector<32x1xf32>
      %64 = vector.shape_cast %63 : vector<32x1xf32> to vector<1x32x1xf32>
      %cst_36 = arith.constant dense<0.000000e+00> : vector<1xf32>
      %65 = vector.multi_reduction <add>, %64, %cst_36 [1, 2] : vector<1x32x1xf32> to vector<1xf32>
      %66 = vector.shape_cast %65 : vector<1xf32> to vector<1x1x1xf32>
      %67 = vector.extract %66[0, 0, 0] : f32 from vector<1x1x1xf32>
      %cst_37 = arith.constant 0.0416666679 : f32
      %68 = arith.mulf %67, %cst_37 : f32
      %cst_38 = arith.constant 0.000000e+00 : f32
      %69 = vector.broadcast %cst_38 : f32 to vector<8x128xf32>
      %70 = vector.broadcast %68 : f32 to vector<8x128xf32>
      %71 = arith.addf %69, %70 : vector<8x128xf32>
      %c0_39 = arith.constant 0 : index
      %c0_40 = arith.constant 0 : index
      %72 = vector.load %arg8[%c0_39, %c0_40] : memref<8x128xf32, #tpu.memory_space<vmem>>, vector<8x128xf32>
      tpu.vector_store %arg8[%c0_39, %c0_40], %71 {strides = array<i32>} : memref<8x128xf32, #tpu.memory_space<vmem>>, vector<8x128xf32>,
    } else {
    }
    return
  }
  func.func @transform_0(%arg0: i32) -> (i32, i32) {
    %c0_i32 = arith.constant 0 : i32
    %c0_i32_0 = arith.constant 0 : i32
    return %c0_i32, %arg0 : i32, i32
  }
  func.func @transform_1(%arg0: i32) -> (i32, i32) {
    %c0_i32 = arith.constant 0 : i32
    %c0_i32_0 = arith.constant 0 : i32
    return %c0_i32, %arg0 : i32, i32
  }
  func.func @transform_2(%arg0: i32) -> (i32, i32) {
    %c0_i32 = arith.constant 0 : i32
    %c0_i32_0 = arith.constant 0 : i32
    %c0_i32_1 = arith.constant 0 : i32
    return %c0_i32, %c0_i32_0 : i32, i32
  }
  func.func @transform_3(%arg0: i32) -> (i32, i32) {
    %c0_i32 = arith.constant 0 : i32
    %c0_i32_0 = arith.constant 0 : i32
    %c0_i32_1 = arith.constant 0 : i32
    return %c0_i32, %c0_i32_0 : i32, i32
  }
  func.func @transform_4(%arg0: i32) -> (i32, i32) {
    %c0_i32 = arith.constant 0 : i32
    %c0_i32_0 = arith.constant 0 : i32
    %c0_i32_1 = arith.constant 0 : i32
    return %c0_i32, %c0_i32_0 : i32, i32
  }
  func.func @transform_5(%arg0: i32) -> (i32, i32) {
    %c0_i32 = arith.constant 0 : i32
    %c0_i32_0 = arith.constant 0 : i32
    %c0_i32_1 = arith.constant 0 : i32
    return %c0_i32, %c0_i32_0 : i32, i32
  }
  func.func @transform_6(%arg0: i32) -> (i32, i32) {
    %c0_i32 = arith.constant 0 : i32
    %c0_i32_0 = arith.constant 0 : i32
    %c0_i32_1 = arith.constant 0 : i32
    return %c0_i32, %c0_i32_0 : i32, i32
  }
  func.func @transform_7(%arg0: i32) -> (i32, i32) {
    %c0_i32 = arith.constant 0 : i32
    %c0_i32_0 = arith.constant 0 : i32
    %c0_i32_1 = arith.constant 0 : i32
    return %c0_i32, %c0_i32_0 : i32, i32
  }
}

</mosaic_0001>

<llo_original>
// kernel: tpu_custom_call.1
$region0: #{tpu_custom_call.1}
  #allocation0 [shape = 'u32[]', space=smem, size = 0x4, offset = 0x4, fixed_abs, tag = 'smem constant byte address 0x4 - core index']
  #allocation1 [shape = 'u32[144,128]{1,0:T(1,128)}', space=vmem, size = 0x12000, scoped, tag = 'internal scratch']
  #allocation2 [shape = 'f32[16,16]{1,0:T(8,128)}', space=vmem, size = 0x2000, scoped, tag = 'scratch operand']
  %s0 = inlined_call_operand.vmem [shape: f32[16,1024], index: 0, kind: input, shape index: {}]
  %s1 = inlined_call_operand.hbm [shape: f32[8,1024], index: 1, kind: input, shape index: {}]
  %s2 = inlined_call_operand.vmem [shape: f32[16,8], index: 2, kind: input, shape index: {}]
  %s3 = inlined_call_operand.hbm [shape: f32[8,16], index: 3, kind: input, shape index: {}]
  %s4 = inlined_call_operand.vmem [shape: f32[32,16], index: 4, kind: input, shape index: {}]
  %s5 = inlined_call_operand.vmem [shape: f32[32,16], index: 5, kind: input, shape index: {}]
  %s6 = inlined_call_operand.vmem [shape: f32[32,8], index: 6, kind: input, shape index: {}]
  %s7 = inlined_call_operand.hbm [shape: f32[8,128], index: 7, kind: output, shape index: {}]
  %s8 = sld [smem:[#allocation0]]
  $region100: #{tpu_custom_call.1} parent=0
    _
  %s10 = ssub.s32 1, %s8
  %s11 = scalar_select 0, %s10, %s8
  $region1: #{tpu_custom_call.1} parent=0
    #allocation3 [shape = 'u8[65536]{0}', space=vmem, size = 0x10000, scoped, tag = 'input window, operand 0']
    #allocation4 [shape = 'u8[32768]{0}', space=vmem, size = 0x8000, scoped, tag = 'input window, operand 1']
    #allocation5 [shape = 's32[2]{0}', space=sflag, size = 0x8, scoped, tag = 'scoped memory for tpu_custom_call.1']
    #allocation6 [shape = 's32[2]{0}', space=sflag, size = 0x8, scoped, tag = 'scoped memory for tpu_custom_call.1']
    #allocation7 [shape = 'u8[4096]{0}', space=vmem, size = 0x1000, scoped, tag = 'input window, operand 3, single buffered']
    #allocation8 [shape = 's32[1]{0}', space=sflag, size = 0x4, scoped, tag = 'scoped memory for tpu_custom_call.1']
    #allocation9 [shape = 'u8[4096]{0}', space=vmem, size = 0x1000, scoped, tag = 'output window, operand 0, single buffered']
    %12 = vsyncpa [#allocation5], 0
    %s13 = scalar_lea.sflag [#allocation5], 1
    %14 = vsyncpa %s13, 0
    %15 = vsyncpa [#allocation8], 0
    %16 = vsyncpa [#allocation6], 0
    loop: start=0, step=1, limit=4
    $region2: #{tpu_custom_call.1} parent=1 // loop_pre_header
      _
    $region3: #{tpu_custom_call.1} parent=1 // loop_header
      %s18 = sphi 0, %s22
      %p19 = scmp.ge.s32.totalorder %s18, 4
      %s28 = sphi 0, %s30
      %s31 = sphi 0, %s28
      %s32 = sphi 0, %s31
      %s48 = sphi 0, %s32
      %s54 = sphi 0, %s56
      %s57 = sphi 0, %s54
      %s58 = sphi 0, %s57
      %s74 = sphi 0, %s58
      %s78 = sphi 0, %s78
      %s80 = sphi 0, %s78
      %s81 = sphi 0, %s80
      %s95 = sphi 0, %s81
      %s99 = sphi 0, %s99
      %s101 = sphi 0, %s99
      %s102 = sphi 0, %s101
      %s116 = sphi 0, %s102
      %s120 = sphi 0, %s120
      %s122 = sphi 0, %s120
      %s123 = sphi 0, %s122
      %s137 = sphi 0, %s123
      %s141 = sphi 0, %s141
      %s143 = sphi 0, %s141
      %s144 = sphi 0, %s143
      %s158 = sphi 0, %s144
      %s162 = sphi 0, %s162
      %s164 = sphi 0, %s162
      %s165 = sphi 0, %s164
      %s179 = sphi 0, %s165
      %s183 = sphi 0, %s183
      %s185 = sphi 0, %s183
      %s186 = sphi 0, %s185
      %s200 = sphi 0, %s186
    $region4: #{tpu_custom_call.1} parent=1 // loop_header_branch
      %21 = sbr.rel (%p19) target = $region8
    $region5: #{tpu_custom_call.1} parent=1 // loop_body
      %s23 = ssub.s32 %s18, 1
      %s24 = ssub.s32 %s18, 2
      %s25 = sadd.s32 %s18, 1
      %s26 = ssub.s32 %s18, %s25
      %p27 = scmp.eq.s32.totalorder %s26, 0
      %s29 = sadd.s32 %s28, 1
      %s30 = scalar_select %p27, %s28, %s29
      %p33 = pneg %p27
      %p34 = scmp.eq.s32.totalorder %s18, 1
      %p35 = por %p33, %p34
      %p36 = scmp.ne.s32.totalorder %s28, %s31
      %p37 = scmp.eq.s32.totalorder %s18, 0
      %p38 = por %p36, %p37
      %p39 = scmp.ne.s32.totalorder %s28, %s31
      %p40 = scmp.eq.s32.totalorder %s23, 1
      %p41 = por %p39, %p40
      %p42 = scmp.ne.s32.totalorder %s31, %s32
      %p43 = scmp.eq.s32.totalorder %s23, 0
      %p44 = por %p42, %p43
      %p45 = scmp.ne.s32.totalorder %s31, %s32
      %p46 = scmp.eq.s32.totalorder %s24, 1
      %p47 = por %p45, %p46
      %p49 = scmp.ne.s32.totalorder %s32, %s48
      %p50 = scmp.eq.s32.totalorder %s24, 0
      %p51 = por %p49, %p50
      %s52 = ssub.s32 %s18, %s25
      %p53 = scmp.eq.s32.totalorder %s52, 0
      %s55 = sadd.s32 %s54, 1
      %s56 = scalar_select %p53, %s54, %s55
      %p59 = pneg %p53
      %p60 = scmp.eq.s32.totalorder %s18, 1
      %p61 = por %p59, %p60
      %p62 = scmp.ne.s32.totalorder %s54, %s57
      %p63 = scmp.eq.s32.totalorder %s18, 0
      %p64 = por %p62, %p63
      %p65 = scmp.ne.s32.totalorder %s54, %s57
      %p66 = scmp.eq.s32.totalorder %s23, 1
      %p67 = por %p65, %p66
      %p68 = scmp.ne.s32.totalorder %s57, %s58
      %p69 = scmp.eq.s32.totalorder %s23, 0
      %p70 = por %p68, %p69
      %p71 = scmp.ne.s32.totalorder %s57, %s58
      %p72 = scmp.eq.s32.totalorder %s24, 1
      %p73 = por %p71, %p72
      %p75 = scmp.ne.s32.totalorder %s58, %s74
      %p76 = scmp.eq.s32.totalorder %s24, 0
      %p77 = por %p75, %p76
      %s79 = sadd.s32 %s78, 1
      %p82 = scmp.eq.s32.totalorder %s18, 1
      %p83 = scmp.ne.s32.totalorder %s78, %s80
      %p84 = scmp.eq.s32.totalorder %s18, 0
      %p85 = por %p83, %p84
      %p86 = scmp.ne.s32.totalorder %s78, %s80
      %p87 = scmp.eq.s32.totalorder %s23, 1
      %p88 = por %p86, %p87
      %p89 = scmp.ne.s32.totalorder %s80, %s81
      %p90 = scmp.eq.s32.totalorder %s23, 0
      %p91 = por %p89, %p90
      %p92 = scmp.ne.s32.totalorder %s80, %s81
      %p93 = scmp.eq.s32.totalorder %s24, 1
      %p94 = por %p92, %p93
      %p96 = scmp.ne.s32.totalorder %s81, %s95
      %p97 = scmp.eq.s32.totalorder %s24, 0
      %p98 = por %p96, %p97
      %s100 = sadd.s32 %s99, 1
      %p103 = scmp.eq.s32.totalorder %s18, 1
      %p104 = scmp.ne.s32.totalorder %s99, %s101
      %p105 = scmp.eq.s32.totalorder %s18, 0
      %p106 = por %p104, %p105
      %p107 = scmp.ne.s32.totalorder %s99, %s101
      %p108 = scmp.eq.s32.totalorder %s23, 1
      %p109 = por %p107, %p108
      %p110 = scmp.ne.s32.totalorder %s101, %s102
      %p111 = scmp.eq.s32.totalorder %s23, 0
      %p112 = por %p110, %p111
      %p113 = scmp.ne.s32.totalorder %s101, %s102
      %p114 = scmp.eq.s32.totalorder %s24, 1
      %p115 = por %p113, %p114
      %p117 = scmp.ne.s32.totalorder %s102, %s116
      %p118 = scmp.eq.s32.totalorder %s24, 0
      %p119 = por %p117, %p118
      %s121 = sadd.s32 %s120, 1
      %p124 = scmp.eq.s32.totalorder %s18, 1
      %p125 = scmp.ne.s32.totalorder %s120, %s122
      %p126 = scmp.eq.s32.totalorder %s18, 0
      %p127 = por %p125, %p126
      %p128 = scmp.ne.s32.totalorder %s120, %s122
      %p129 = scmp.eq.s32.totalorder %s23, 1
      %p130 = por %p128, %p129
      %p131 = scmp.ne.s32.totalorder %s122, %s123
      %p132 = scmp.eq.s32.totalorder %s23, 0
      %p133 = por %p131, %p132
      %p134 = scmp.ne.s32.totalorder %s122, %s123
      %p135 = scmp.eq.s32.totalorder %s24, 1
      %p136 = por %p134, %p135
      %p138 = scmp.ne.s32.totalorder %s123, %s137
      %p139 = scmp.eq.s32.totalorder %s24, 0
      %p140 = por %p138, %p139
      %s142 = sadd.s32 %s141, 1
      %p145 = scmp.eq.s32.totalorder %s18, 1
      %p146 = scmp.ne.s32.totalorder %s141, %s143
      %p147 = scmp.eq.s32.totalorder %s18, 0
      %p148 = por %p146, %p147
      %p149 = scmp.ne.s32.totalorder %s141, %s143
      %p150 = scmp.eq.s32.totalorder %s23, 1
      %p151 = por %p149, %p150
      %p152 = scmp.ne.s32.totalorder %s143, %s144
      %p153 = scmp.eq.s32.totalorder %s23, 0
      %p154 = por %p152, %p153
      %p155 = scmp.ne.s32.totalorder %s143, %s144
      %p156 = scmp.eq.s32.totalorder %s24, 1
      %p157 = por %p155, %p156
      %p159 = scmp.ne.s32.totalorder %s144, %s158
      %p160 = scmp.eq.s32.totalorder %s24, 0
      %p161 = por %p159, %p160
      %s163 = sadd.s32 %s162, 1
      %p166 = scmp.eq.s32.totalorder %s18, 1
      %p167 = scmp.ne.s32.totalorder %s162, %s164
      %p168 = scmp.eq.s32.totalorder %s18, 0
      %p169 = por %p167, %p168
      %p170 = scmp.ne.s32.totalorder %s162, %s164
      %p171 = scmp.eq.s32.totalorder %s23, 1
      %p172 = por %p170, %p171
      %p173 = scmp.ne.s32.totalorder %s164, %s165
      %p174 = scmp.eq.s32.totalorder %s23, 0
      %p175 = por %p173, %p174
      %p176 = scmp.ne.s32.totalorder %s164, %s165
      %p177 = scmp.eq.s32.totalorder %s24, 1
      %p178 = por %p176, %p177
      %p180 = scmp.ne.s32.totalorder %s165, %s179
      %p181 = scmp.eq.s32.totalorder %s24, 0
      %p182 = por %p180, %p181
      %s184 = sadd.s32 %s183, 1
      %p187 = scmp.eq.s32.totalorder %s18, 1
      %p188 = scmp.ne.s32.totalorder %s183, %s185
      %p189 = scmp.eq.s32.totalorder %s18, 0
      %p190 = por %p188, %p189
      %p191 = scmp.ne.s32.totalorder %s183, %s185
      %p192 = scmp.eq.s32.totalorder %s23, 1
      %p193 = por %p191, %p192
      %p194 = scmp.ne.s32.totalorder %s185, %s186
      %p195 = scmp.eq.s32.totalorder %s23, 0
      %p196 = por %p194, %p195
      %p197 = scmp.ne.s32.totalorder %s185, %s186
      %p198 = scmp.eq.s32.totalorder %s24, 1
      %p199 = por %p197, %p198
      %p201 = scmp.ne.s32.totalorder %s186, %s200
      %p202 = scmp.eq.s32.totalorder %s24, 0
      %p203 = por %p201, %p202
      %p204 = scmp.le.s32.totalorder 1, %s18
      %p205 = scmp.lt.s32.totalorder %s18, 3
      %p206 = pnand %p204, %p205
      %p207 = pneg %p206
      // Predicated region
      $region9: #{tpu_custom_call.1} parent=5 // pred_check
        _
      $region10: #{tpu_custom_call.1} parent=5 // pred_check_branch
        %209 = sbr.rel (%p206) target = $region12
      $region11: #{tpu_custom_call.1} parent=5 // pred_region
        %s210 = ssub.s32 %s18, 1
        // Predicated region
        $region13: #{tpu_custom_call.1} parent=11 // pred_check
          %p211 = pneg %p91
        $region14: #{tpu_custom_call.1} parent=11 // pred_check_branch
          %213 = sbr.rel (%p211) target = $region16
        $region15: #{tpu_custom_call.1} parent=11 // pred_region
          _
        $region16: #{tpu_custom_call.1} parent=11 // pred_fallthru
          _
        // Predicated region
        $region17: #{tpu_custom_call.1} parent=11 // pred_check
          %p214 = pneg %p112
        $region18: #{tpu_custom_call.1} parent=11 // pred_check_branch
          %216 = sbr.rel (%p214) target = $region20
        $region19: #{tpu_custom_call.1} parent=11 // pred_region
          %s218 = ssub.s32 128, 128
          %219 = vsyncadd [#allocation8], %s218
          %s221 = sshll.u32 [#allocation7], 4
          %s222 = int_to_ptr.vmem [resolvable:$true] %s221
          %224 = dma.hbm_to_vmem [thread:$0]  %s3, 128, %s222, [#allocation8]
        $region20: #{tpu_custom_call.1} parent=11 // pred_fallthru
          _
        // Predicated region
        $region21: #{tpu_custom_call.1} parent=11 // pred_check
          %p225 = pneg %p133
        $region22: #{tpu_custom_call.1} parent=11 // pred_check_branch
          %227 = sbr.rel (%p225) target = $region24
        $region23: #{tpu_custom_call.1} parent=11 // pred_region
          _
        $region24: #{tpu_custom_call.1} parent=11 // pred_fallthru
          _
        // Predicated region
        $region25: #{tpu_custom_call.1} parent=11 // pred_check
          %p228 = pneg %p154
        $region26: #{tpu_custom_call.1} parent=11 // pred_check_branch
          %230 = sbr.rel (%p228) target = $region28
        $region27: #{tpu_custom_call.1} parent=11 // pred_region
          _
        $region28: #{tpu_custom_call.1} parent=11 // pred_fallthru
          _
        // Predicated region
        $region29: #{tpu_custom_call.1} parent=11 // pred_check
          %p231 = pneg %p175
        $region30: #{tpu_custom_call.1} parent=11 // pred_check_branch
          %233 = sbr.rel (%p231) target = $region32
        $region31: #{tpu_custom_call.1} parent=11 // pred_region
          _
        $region32: #{tpu_custom_call.1} parent=11 // pred_fallthru
          _
      $region12: #{tpu_custom_call.1} parent=5 // pred_fallthru
        _
      %p234 = scmp.lt.s32.totalorder %s18, 2
      // Predicated region
      $region33: #{tpu_custom_call.1} parent=5 // pred_check
        %p235 = pneg %p234
      $region34: #{tpu_custom_call.1} parent=5 // pred_check_branch
        %237 = sbr.rel (%p235) target = $region36
      $region35: #{tpu_custom_call.1} parent=5 // pred_region
        // Predicated region
        $region37: #{tpu_custom_call.1} parent=35 // pred_check
          %p238 = pneg %p38
        $region38: #{tpu_custom_call.1} parent=35 // pred_check_branch
          %240 = sbr.rel (%p238) target = $region40
        $region39: #{tpu_custom_call.1} parent=35 // pred_region
          %s241 = sand.u32 %s28, 1
          %s242 = sand.u32 %s28, 1
          %s243 = smul.addr %s242, 64
          %s244 = scalar_lea.vmem [#allocation3], %s243
          %s245 = smul.u32 4, %s18
          %s246 = smul.addr %s245, 8
          %s247 = scalar_lea.vmem %s0, %s246
          // Predicated region
          $region41: #{tpu_custom_call.1} parent=39 // pred_check
            _
          $region42: #{tpu_custom_call.1} parent=39 // pred_check_branch
            %249 = sbr.rel (0) target = $region44
          $region43: #{tpu_custom_call.1} parent=39 // pred_region
            // Predicated region
            $region45: #{tpu_custom_call.1} parent=43 // pred_check
              _
            $region46: #{tpu_custom_call.1} parent=43 // pred_check_branch
              %251 = sbr.rel (0) target = $region48
            $region47: #{tpu_custom_call.1} parent=43 // pred_region
              loop: start=0, step=1, limit=1
              $region49: #{tpu_custom_call.1} parent=47 // loop_pre_header
                _
              $region50: #{tpu_custom_call.1} parent=47 // loop_header
                %s253 = sphi 0, %s257
                %p254 = scmp.ge.s32.totalorder %s253, 1
                %s258 = sphi %s247, %s247
                %s259 = sphi %s244, %s244
              $region51: #{tpu_custom_call.1} parent=47 // loop_header_branch
                %256 = sbr.rel (%p254) target = $region55
              $region52: #{tpu_custom_call.1} parent=47 // loop_body
                %v260 = vld [vmem:[%s258] sm:$0xff]
                %261 = vst [vmem:[%s259] sm:$0xff] %v260
                %v262 = vld [vmem:[%s258 + $0x8] sm:$0xff]
                %263 = vst [vmem:[%s259 + $0x8] sm:$0xff] %v262
                %v264 = vld [vmem:[%s258 + $0x10] sm:$0xff]
                %265 = vst [vmem:[%s259 + $0x10] sm:$0xff] %v264
                %v266 = vld [vmem:[%s258 + $0x18] sm:$0xff]
                %267 = vst [vmem:[%s259 + $0x18] sm:$0xff] %v266
                %v268 = vld [vmem:[%s258 + $0x40] sm:$0xff]
                %269 = vst [vmem:[%s259 + $0x20] sm:$0xff] %v268
                %v270 = vld [vmem:[%s258 + $0x48] sm:$0xff]
                %271 = vst [vmem:[%s259 + $0x28] sm:$0xff] %v270
                %v272 = vld [vmem:[%s258 + $0x50] sm:$0xff]
                %273 = vst [vmem:[%s259 + $0x30] sm:$0xff] %v272
                %v274 = vld [vmem:[%s258 + $0x58] sm:$0xff]
                %275 = vst [vmem:[%s259 + $0x38] sm:$0xff] %v274
              $region53: #{tpu_custom_call.1} parent=47 // loop_footer
                %s257 = sadd.s32 1, %s253
              $region54: #{tpu_custom_call.1} parent=47 // loop_footer_branch
                %252 = sbr.rel target = $region50
              $region55: #{tpu_custom_call.1} parent=47 // loop_exit
                _
            $region48: #{tpu_custom_call.1} parent=43 // pred_fallthru
              _
            // Predicated region
            $region56: #{tpu_custom_call.1} parent=43 // pred_check
              _
            $region57: #{tpu_custom_call.1} parent=43 // pred_check_branch
              %277 = sbr.rel target = $region59
            $region58: #{tpu_custom_call.1} parent=43 // pred_region
              _
            $region59: #{tpu_custom_call.1} parent=43 // pred_fallthru
              _
          $region44: #{tpu_custom_call.1} parent=39 // pred_fallthru
            _
          %278 = vnop
        $region40: #{tpu_custom_call.1} parent=35 // pred_fallthru
          _
        // Predicated region
        $region60: #{tpu_custom_call.1} parent=35 // pred_check
          %p279 = pneg %p64
        $region61: #{tpu_custom_call.1} parent=35 // pred_check_branch
          %281 = sbr.rel (%p279) target = $region63
        $region62: #{tpu_custom_call.1} parent=35 // pred_region
          %s282 = sand.u32 %s54, 1
          %s283 = scalar_lea.sflag [#allocation5], %s282
          %s284 = sand.u32 %s54, 1
          %s285 = smul.addr %s284, 32
          %s286 = scalar_lea.vmem [#allocation4], %s285
          %s287 = smul.u32 4, %s18
          %s289 = ssub.s32 512, 512
          %290 = vsyncadd %s283, %s289
          %s291 = smul.addr %s287, 128
          %s292 = scalar_lea.hbm %s1, %s291
          %s294 = sshll.u32 %s286, 4
          %s295 = int_to_ptr.vmem [resolvable:$true] %s294
          %297 = dma.hbm_to_vmem [thread:$0]  %s292, 512, %s295, %s283
        $region63: #{tpu_custom_call.1} parent=35 // pred_fallthru
          _
      $region36: #{tpu_custom_call.1} parent=5 // pred_fallthru
        _
      %p298 = scmp.le.s32.totalorder 1, %s18
      %p299 = scmp.lt.s32.totalorder %s18, 3
      %p300 = pnand %p298, %p299
      %p301 = pneg %p300
      // Predicated region
      $region64: #{tpu_custom_call.1} parent=5 // pred_check
        _
      $region65: #{tpu_custom_call.1} parent=5 // pred_check_branch
        %303 = sbr.rel (%p300) target = $region67
      $region66: #{tpu_custom_call.1} parent=5 // pred_region
        %s304 = ssub.s32 %s18, 1
        %s305 = sand.u32 %s31, 1
        %s306 = sand.u32 %s31, 1
        %s307 = smul.addr %s306, 64
        %s308 = scalar_lea.vmem [#allocation3], %s307
        // Predicated region
        $region68: #{tpu_custom_call.1} parent=66 // pred_check
          %p309 = pneg %p44
        $region69: #{tpu_custom_call.1} parent=66 // pred_check_branch
          %311 = sbr.rel (%p309) target = $region71
        $region70: #{tpu_custom_call.1} parent=66 // pred_region
          _
        $region71: #{tpu_custom_call.1} parent=66 // pred_fallthru
          _
        %s312 = sand.u32 %s57, 1
        %s313 = scalar_lea.sflag [#allocation5], %s312
        %s314 = sand.u32 %s57, 1
        %s315 = smul.addr %s314, 32
        %s316 = scalar_lea.vmem [#allocation4], %s315
        // Predicated region
        $region72: #{tpu_custom_call.1} parent=66 // pred_check
          %p317 = pneg %p70
        $region73: #{tpu_custom_call.1} parent=66 // pred_check_branch
          %319 = sbr.rel (%p317) target = $region75
        $region74: #{tpu_custom_call.1} parent=66 // pred_region
          %320 = dma.done %s313, 512
        $region75: #{tpu_custom_call.1} parent=66 // pred_fallthru
          _
        // Predicated region
        $region76: #{tpu_custom_call.1} parent=66 // pred_check
          %p321 = pneg %p112
        $region77: #{tpu_custom_call.1} parent=66 // pred_check_branch
          %323 = sbr.rel (%p321) target = $region79
        $region78: #{tpu_custom_call.1} parent=66 // pred_region
          %324 = dma.done [#allocation8], 128
        $region79: #{tpu_custom_call.1} parent=66 // pred_fallthru
          _
        %s325 = sand.u32 %s31, 1
        %s326 = sand.u32 %s31, 1
        %s327 = smul.addr %s326, 64
        %s328 = scalar_lea.vmem [#allocation3], %s327
        %p329 = pneg %p44
        %p330 = pneg %p41
        %s331 = sand.u32 %s57, 1
        %s332 = scalar_lea.sflag [#allocation5], %s331
        %s333 = sand.u32 %s57, 1
        %s334 = smul.addr %s333, 32
        %s335 = scalar_lea.vmem [#allocation4], %s334
        %p336 = pneg %p70
        %p337 = pneg %p67
        %p338 = pneg %p91
        %p339 = pneg %p88
        %p340 = pneg %p112
        %p341 = pneg %p109
        %p342 = pneg %p133
        %p343 = pneg %p130
        %p344 = pneg %p154
        %p345 = pneg %p151
        %p346 = pneg %p175
        %p347 = pneg %p172
        %p348 = pneg %p196
        %p349 = pneg %p193
        %s350 = smul.u32 4, %s23
        %s351 = smul.u32 4, %s23
        %p352 = scmp.eq.s32.totalorder %s23, 0
        // Predicated region
        $region80: #{tpu_custom_call.1} parent=66 // pred_check
          %p353 = pneg %p352
        $region81: #{tpu_custom_call.1} parent=66 // pred_check_branch
          %355 = sbr.rel (%p353) target = $region83
        $region82: #{tpu_custom_call.1} parent=66 // pred_region
          %vm356 = vcmask 130048
          %357 = vst.msk [vmem:[#allocation2] sm:$0xff] %vm356, 0.0
          %358 = vst.msk [vmem:[#allocation2 + $0x8] sm:$0xff] %vm356, 0.0
        $region83: #{tpu_custom_call.1} parent=66 // pred_fallthru
          _
        %v359 = vld [vmem:[%s2] sm:$0xff]
        %v360 = vld [vmem:[%s2 + $0x8] sm:$0xff]
        %v361 = vld [vmem:[%s316] sm:$0xff]
        %v362 = vld [vmem:[%s316 + $0x8] sm:$0xff]
        %v363 = vld [vmem:[%s316 + $0x10] sm:$0xff]
        %v364 = vld [vmem:[%s316 + $0x18] sm:$0xff]
        %vm365 = vcmask 64512
        %v367 = vsel %vm365, %v359, 0
        %v370 = vsel %vm365, %v360, 0
        %372 = vmatprep.subr.mxu0 0.0
        %373 = vmatpush1.msra.mxu0 0.0
        %374 = vmatprep.subr.mxu0 0.0
        %375 = vmatpush1.msra.mxu0 0.0
        %376 = vmatprep.subr.mxu0 0.0
        %377 = vmatpush1.msra.mxu0 0.0
        %378 = vmatprep.subr.mxu0 0.0
        %379 = vmatpush1.msra.mxu0 0.0
        %380 = vmatprep.subr.mxu0 0.0
        %381 = vmatpush1.msra.mxu0 0.0
        %382 = vmatprep.subr.mxu0 0.0
        %383 = vmatpush1.msra.mxu0 0.0
        %384 = vmatprep.subr.mxu0 0.0
        %385 = vmatpush1.msra.mxu0 0.0
        %386 = vmatprep.subr.mxu0 0.0
        %387 = vmatpush1.msra.mxu0 0.0
        %388 = vmatprep.subr.mxu0 0.0
        %389 = vmatpush1.msra.mxu0 0.0
        %390 = vmatprep.subr.mxu0 0.0
        %391 = vmatpush1.msra.mxu0 0.0
        %392 = vmatprep.subr.mxu0 0.0
        %393 = vmatpush1.msra.mxu0 0.0
        %394 = vmatprep.subr.mxu0 0.0
        %395 = vmatpush1.msra.mxu0 0.0
        %396 = vmatprep.subr.mxu0 0.0
        %397 = vmatpush1.msra.mxu0 0.0
        %398 = vmatprep.subr.mxu0 0.0
        %399 = vmatpush1.msra.mxu0 0.0
        %400 = vmatprep.subr.mxu0 0.0
        %401 = vmatpush1.msra.mxu0 0.0
        %402 = vmatprep.subr.mxu0 %v362
        %403 = vmatpush1.msra.mxu0 %v361
        %404 = vmatprep.subr.mxu0 0.0
        %405 = vmatpush2.msra.mxu0 0.0
        %406 = vmatprep.subr.mxu0 0.0
        %407 = vmatpush2.msra.mxu0 0.0
        %408 = vmatprep.subr.mxu0 0.0
        %409 = vmatpush2.msra.mxu0 0.0
        %410 = vmatprep.subr.mxu0 0.0
        %411 = vmatpush2.msra.mxu0 0.0
        %412 = vmatprep.subr.mxu0 0.0
        %413 = vmatpush2.msra.mxu0 0.0
        %414 = vmatprep.subr.mxu0 0.0
        %415 = vmatpush2.msra.mxu0 0.0
        %416 = vmatprep.subr.mxu0 0.0
        %417 = vmatpush2.msra.mxu0 0.0
        %418 = vmatprep.subr.mxu0 0.0
        %419 = vmatpush2.msra.mxu0 0.0
        %420 = vmatprep.subr.mxu0 0.0
        %421 = vmatpush2.msra.mxu0 0.0
        %422 = vmatprep.subr.mxu0 0.0
        %423 = vmatpush2.msra.mxu0 0.0
        %424 = vmatprep.subr.mxu0 0.0
        %425 = vmatpush2.msra.mxu0 0.0
        %426 = vmatprep.subr.mxu0 0.0
        %427 = vmatpush2.msra.mxu0 0.0
        %428 = vmatprep.subr.mxu0 0.0
        %429 = vmatpush2.msra.mxu0 0.0
        %430 = vmatprep.subr.mxu0 0.0
        %431 = vmatpush2.msra.mxu0 0.0
        %432 = vmatprep.subr.mxu0 0.0
        %433 = vmatpush2.msra.mxu0 0.0
        %434 = vmatprep.subr.mxu0 0.0
        %435 = vmatpush2.msra.mxu0 0.0
        %436 = vmatprep.mubr.f32.mxu0 0.0
        %437 = vmatmul.mubr.f32.gmra.mxu0 %v367
        %v438 = vpop.f32.mrf.mxu0
        %v439 = vadd.f32 0.0, %v438
        %v440 = vpop.f32.mrf.mxu0
        %v441 = vadd.f32 0.0, %v440
        %442 = vmatprep.mubr.f32.mxu0 0.0
        %443 = vmatmul.mubr.f32.gmra.mxu0 %v370
        %v444 = vpop.f32.mrf.mxu0
        %v445 = vadd.f32 0.0, %v444
        %v446 = vpop.f32.mrf.mxu0
        %v447 = vadd.f32 0.0, %v446
        %448 = vdwg.mxu0
        %449 = vmatprep.subr.mxu0 0.0
        %450 = vmatpush1.msra.mxu0 0.0
        %451 = vmatprep.subr.mxu0 0.0
        %452 = vmatpush1.msra.mxu0 0.0
        %453 = vmatprep.subr.mxu0 0.0
        %454 = vmatpush1.msra.mxu0 0.0
        %455 = vmatprep.subr.mxu0 0.0
        %456 = vmatpush1.msra.mxu0 0.0
        %457 = vmatprep.subr.mxu0 0.0
        %458 = vmatpush1.msra.mxu0 0.0
        %459 = vmatprep.subr.mxu0 0.0
        %460 = vmatpush1.msra.mxu0 0.0
        %461 = vmatprep.subr.mxu0 0.0
        %462 = vmatpush1.msra.mxu0 0.0
        %463 = vmatprep.subr.mxu0 0.0
        %464 = vmatpush1.msra.mxu0 0.0
        %465 = vmatprep.subr.mxu0 0.0
        %466 = vmatpush1.msra.mxu0 0.0
        %467 = vmatprep.subr.mxu0 0.0
        %468 = vmatpush1.msra.mxu0 0.0
        %469 = vmatprep.subr.mxu0 0.0
        %470 = vmatpush1.msra.mxu0 0.0
        %471 = vmatprep.subr.mxu0 0.0
        %472 = vmatpush1.msra.mxu0 0.0
        %473 = vmatprep.subr.mxu0 0.0
        %474 = vmatpush1.msra.mxu0 0.0
        %475 = vmatprep.subr.mxu0 0.0
        %476 = vmatpush1.msra.mxu0 0.0
        %477 = vmatprep.subr.mxu0 0.0
        %478 = vmatpush1.msra.mxu0 0.0
        %479 = vmatprep.subr.mxu0 %v364
        %480 = vmatpush1.msra.mxu0 %v363
        %481 = vmatprep.subr.mxu0 0.0
        %482 = vmatpush2.msra.mxu0 0.0
        %483 = vmatprep.subr.mxu0 0.0
        %484 = vmatpush2.msra.mxu0 0.0
        %485 = vmatprep.subr.mxu0 0.0
        %486 = vmatpush2.msra.mxu0 0.0
        %487 = vmatprep.subr.mxu0 0.0
        %488 = vmatpush2.msra.mxu0 0.0
        %489 = vmatprep.subr.mxu0 0.0
        %490 = vmatpush2.msra.mxu0 0.0
        %491 = vmatprep.subr.mxu0 0.0
        %492 = vmatpush2.msra.mxu0 0.0
        %493 = vmatprep.subr.mxu0 0.0
        %494 = vmatpush2.msra.mxu0 0.0
        %495 = vmatprep.subr.mxu0 0.0
        %496 = vmatpush2.msra.mxu0 0.0
        %497 = vmatprep.subr.mxu0 0.0
        %498 = vmatpush2.msra.mxu0 0.0
        %499 = vmatprep.subr.mxu0 0.0
        %500 = vmatpush2.msra.mxu0 0.0
        %501 = vmatprep.subr.mxu0 0.0
        %502 = vmatpush2.msra.mxu0 0.0
        %503 = vmatprep.subr.mxu0 0.0
        %504 = vmatpush2.msra.mxu0 0.0
        %505 = vmatprep.subr.mxu0 0.0
        %506 = vmatpush2.msra.mxu0 0.0
        %507 = vmatprep.subr.mxu0 0.0
        %508 = vmatpush2.msra.mxu0 0.0
        %509 = vmatprep.subr.mxu0 0.0
        %510 = vmatpush2.msra.mxu0 0.0
        %511 = vmatprep.subr.mxu0 0.0
        %512 = vmatpush2.msra.mxu0 0.0
        %513 = vmatprep.mubr.f32.mxu0 0.0
        %514 = vmatmul.mubr.f32.gmra.mxu0 %v367
        %v515 = vpop.f32.mrf.mxu0
        %v516 = vadd.f32 0.0, %v515
        %v517 = vpop.f32.mrf.mxu0
        %v518 = vadd.f32 0.0, %v517
        %519 = vmatprep.mubr.f32.mxu0 0.0
        %520 = vmatmul.mubr.f32.gmra.mxu0 %v370
        %v521 = vpop.f32.mrf.mxu0
        %v522 = vadd.f32 0.0, %v521
        %v523 = vpop.f32.mrf.mxu0
        %v524 = vadd.f32 0.0, %v523
        %525 = vdwg.mxu0
        %v526 = vld [vmem:[%s308] sm:$0xff]
        %v527 = vld [vmem:[%s308 + $0x8] sm:$0xff]
        %v528 = vld [vmem:[%s308 + $0x10] sm:$0xff]
        %v529 = vld [vmem:[%s308 + $0x18] sm:$0xff]
        %v530 = vld [vmem:[%s308 + $0x20] sm:$0xff]
        %v531 = vld [vmem:[%s308 + $0x28] sm:$0xff]
        %v532 = vld [vmem:[%s308 + $0x30] sm:$0xff]
        %v533 = vld [vmem:[%s308 + $0x38] sm:$0xff]
        %v534 = vsub.f32 %v526, %v439
        %v535 = vsub.f32 %v527, %v441
        %v536 = vsub.f32 %v528, %v516
        %v537 = vsub.f32 %v529, %v518
        %v538 = vsub.f32 %v530, %v445
        %v539 = vsub.f32 %v531, %v447
        %v540 = vsub.f32 %v532, %v522
        %v541 = vsub.f32 %v533, %v524
        %v542 = vld [vmem:[#allocation2] sm:$0xff]
        %v543 = vld [vmem:[#allocation2 + $0x8] sm:$0xff]
        %544 = vmatprep.subr.mxu0 0.0
        %545 = vmatpush1.xpose.msra.mxu0 0.0
        %546 = vmatprep.subr.mxu0 0.0
        %547 = vmatpush1.xpose.msra.mxu0 0.0
        %548 = vmatprep.subr.mxu0 0.0
        %549 = vmatpush1.xpose.msra.mxu0 0.0
        %550 = vmatprep.subr.mxu0 0.0
        %551 = vmatpush1.xpose.msra.mxu0 0.0
        %552 = vmatprep.subr.mxu0 0.0
        %553 = vmatpush1.xpose.msra.mxu0 0.0
        %554 = vmatprep.subr.mxu0 0.0
        %555 = vmatpush1.xpose.msra.mxu0 0.0
        %556 = vmatprep.subr.mxu0 0.0
        %557 = vmatpush1.xpose.msra.mxu0 0.0
        %558 = vmatprep.subr.mxu0 0.0
        %559 = vmatpush1.xpose.msra.mxu0 0.0
        %560 = vmatprep.subr.mxu0 0.0
        %561 = vmatpush1.xpose.msra.mxu0 0.0
        %562 = vmatprep.subr.mxu0 0.0
        %563 = vmatpush1.xpose.msra.mxu0 0.0
        %564 = vmatprep.subr.mxu0 0.0
        %565 = vmatpush1.xpose.msra.mxu0 0.0
        %566 = vmatprep.subr.mxu0 0.0
        %567 = vmatpush1.xpose.msra.mxu0 0.0
        %568 = vmatprep.subr.mxu0 0.0
        %569 = vmatpush1.xpose.msra.mxu0 0.0
        %570 = vmatprep.subr.mxu0 0.0
        %571 = vmatpush1.xpose.msra.mxu0 0.0
        %572 = vmatprep.subr.mxu0 %v539
        %573 = vmatpush1.xpose.msra.mxu0 %v538
        %574 = vmatprep.subr.mxu0 %v535
        %575 = vmatpush1.xpose.msra.mxu0 %v534
        %576 = vmatprep.subr.mxu0 0.0
        %577 = vmatpush2.xpose.msra.mxu0 0.0
        %578 = vmatprep.subr.mxu0 0.0
        %579 = vmatpush2.xpose.msra.mxu0 0.0
        %580 = vmatprep.subr.mxu0 0.0
        %581 = vmatpush2.xpose.msra.mxu0 0.0
        %582 = vmatprep.subr.mxu0 0.0
        %583 = vmatpush2.xpose.msra.mxu0 0.0
        %584 = vmatprep.subr.mxu0 0.0
        %585 = vmatpush2.xpose.msra.mxu0 0.0
        %586 = vmatprep.subr.mxu0 0.0
        %587 = vmatpush2.xpose.msra.mxu0 0.0
        %588 = vmatprep.subr.mxu0 0.0
        %589 = vmatpush2.xpose.msra.mxu0 0.0
        %590 = vmatprep.subr.mxu0 0.0
        %591 = vmatpush2.xpose.msra.mxu0 0.0
        %592 = vmatprep.subr.mxu0 0.0
        %593 = vmatpush2.xpose.msra.mxu0 0.0
        %594 = vmatprep.subr.mxu0 0.0
        %595 = vmatpush2.xpose.msra.mxu0 0.0
        %596 = vmatprep.subr.mxu0 0.0
        %597 = vmatpush2.xpose.msra.mxu0 0.0
        %598 = vmatprep.subr.mxu0 0.0
        %599 = vmatpush2.xpose.msra.mxu0 0.0
        %600 = vmatprep.subr.mxu0 0.0
        %601 = vmatpush2.xpose.msra.mxu0 0.0
        %602 = vmatprep.subr.mxu0 0.0
        %603 = vmatpush2.xpose.msra.mxu0 0.0
        %604 = vmatprep.subr.mxu0 0.0
        %605 = vmatpush2.xpose.msra.mxu0 0.0
        %606 = vmatprep.subr.mxu0 0.0
        %607 = vmatpush2.xpose.msra.mxu0 0.0
        %608 = vmatprep.mubr.f32.mxu0 %v535
        %609 = vmatmul.mubr.f32.gmra.mxu0 %v534
        %v610 = vpop.f32.mrf.mxu0
        %v611 = vadd.f32 0.0, %v610
        %v612 = vpop.f32.mrf.mxu0
        %613 = vmatprep.mubr.f32.mxu0 %v539
        %614 = vmatmul.mubr.f32.gmra.mxu0 %v538
        %v615 = vpop.f32.mrf.mxu0
        %v616 = vadd.f32 0.0, %v615
        %v617 = vpop.f32.mrf.mxu0
        %618 = vdwg.mxu0
        %619 = vmatprep.subr.mxu0 0.0
        %620 = vmatpush1.xpose.msra.mxu0 0.0
        %621 = vmatprep.subr.mxu0 0.0
        %622 = vmatpush1.xpose.msra.mxu0 0.0
        %623 = vmatprep.subr.mxu0 0.0
        %624 = vmatpush1.xpose.msra.mxu0 0.0
        %625 = vmatprep.subr.mxu0 0.0
        %626 = vmatpush1.xpose.msra.mxu0 0.0
        %627 = vmatprep.subr.mxu0 0.0
        %628 = vmatpush1.xpose.msra.mxu0 0.0
        %629 = vmatprep.subr.mxu0 0.0
        %630 = vmatpush1.xpose.msra.mxu0 0.0
        %631 = vmatprep.subr.mxu0 0.0
        %632 = vmatpush1.xpose.msra.mxu0 0.0
        %633 = vmatprep.subr.mxu0 0.0
        %634 = vmatpush1.xpose.msra.mxu0 0.0
        %635 = vmatprep.subr.mxu0 0.0
        %636 = vmatpush1.xpose.msra.mxu0 0.0
        %637 = vmatprep.subr.mxu0 0.0
        %638 = vmatpush1.xpose.msra.mxu0 0.0
        %639 = vmatprep.subr.mxu0 0.0
        %640 = vmatpush1.xpose.msra.mxu0 0.0
        %641 = vmatprep.subr.mxu0 0.0
        %642 = vmatpush1.xpose.msra.mxu0 0.0
        %643 = vmatprep.subr.mxu0 0.0
        %644 = vmatpush1.xpose.msra.mxu0 0.0
        %645 = vmatprep.subr.mxu0 0.0
        %646 = vmatpush1.xpose.msra.mxu0 0.0
        %647 = vmatprep.subr.mxu0 %v541
        %648 = vmatpush1.xpose.msra.mxu0 %v540
        %649 = vmatprep.subr.mxu0 %v537
        %650 = vmatpush1.xpose.msra.mxu0 %v536
        %651 = vmatprep.subr.mxu0 0.0
        %652 = vmatpush2.xpose.msra.mxu0 0.0
        %653 = vmatprep.subr.mxu0 0.0
        %654 = vmatpush2.xpose.msra.mxu0 0.0
        %655 = vmatprep.subr.mxu0 0.0
        %656 = vmatpush2.xpose.msra.mxu0 0.0
        %657 = vmatprep.subr.mxu0 0.0
        %658 = vmatpush2.xpose.msra.mxu0 0.0
        %659 = vmatprep.subr.mxu0 0.0
        %660 = vmatpush2.xpose.msra.mxu0 0.0
        %661 = vmatprep.subr.mxu0 0.0
        %662 = vmatpush2.xpose.msra.mxu0 0.0
        %663 = vmatprep.subr.mxu0 0.0
        %664 = vmatpush2.xpose.msra.mxu0 0.0
        %665 = vmatprep.subr.mxu0 0.0
        %666 = vmatpush2.xpose.msra.mxu0 0.0
        %667 = vmatprep.subr.mxu0 0.0
        %668 = vmatpush2.xpose.msra.mxu0 0.0
        %669 = vmatprep.subr.mxu0 0.0
        %670 = vmatpush2.xpose.msra.mxu0 0.0
        %671 = vmatprep.subr.mxu0 0.0
        %672 = vmatpush2.xpose.msra.mxu0 0.0
        %673 = vmatprep.subr.mxu0 0.0
        %674 = vmatpush2.xpose.msra.mxu0 0.0
        %675 = vmatprep.subr.mxu0 0.0
        %676 = vmatpush2.xpose.msra.mxu0 0.0
        %677 = vmatprep.subr.mxu0 0.0
        %678 = vmatpush2.xpose.msra.mxu0 0.0
        %679 = vmatprep.subr.mxu0 0.0
        %680 = vmatpush2.xpose.msra.mxu0 0.0
        %681 = vmatprep.subr.mxu0 0.0
        %682 = vmatpush2.xpose.msra.mxu0 0.0
        %683 = vmatprep.mubr.f32.mxu0 %v537
        %684 = vmatmul.mubr.f32.gmra.mxu0 %v536
        %v685 = vpop.f32.mrf.mxu0
        %v686 = vadd.f32 %v611, %v685
        %v687 = vpop.f32.mrf.mxu0
        %688 = vmatprep.mubr.f32.mxu0 %v541
        %689 = vmatmul.mubr.f32.gmra.mxu0 %v540
        %v690 = vpop.f32.mrf.mxu0
        %v691 = vadd.f32 %v616, %v690
        %v692 = vpop.f32.mrf.mxu0
        %693 = vdwg.mxu0
        %v694 = vadd.f32 %v542, %v686
        %v695 = vadd.f32 %v543, %v691
        %vm696 = vcmask 130048
        %697 = vst.msk [vmem:[#allocation2] sm:$0xff] %vm696, %v694
        %698 = vst.msk [vmem:[#allocation2 + $0x8] sm:$0xff] %vm696, %v695
        %p699 = scmp.eq.s32.totalorder %s23, 1
        // Predicated region
        $region84: #{tpu_custom_call.1} parent=66 // pred_check
          %p700 = pneg %p699
        $region85: #{tpu_custom_call.1} parent=66 // pred_check_branch
          %702 = sbr.rel (%p700) target = $region87
        $region86: #{tpu_custom_call.1} parent=66 // pred_region
          %v703 = vld [vmem:[#allocation2] sm:$0xff]
          %v704 = vld [vmem:[#allocation2 + $0x8] sm:$0xff]
          %v705 = vlaneseq
          %v706 = vshrl.u32 %v705, 7
          %v707 = vadd.s32 %v706, 8
          %v708 = vlaneseq
          %v709 = vand.u32 %v708, 127
          %vm710 = vcmp.eq.s32.totalorder %v706, %v709
          %vm711 = vcmp.eq.s32.totalorder %v707, %v709
          %v712 = vsel %vm710, %v703, 0.0
          %v713 = vsel %vm711, %v704, 0.0
          %v714 = vsel %vm696, %v712, 0.0
          %715 = vadd.xlane.f32.xlu0 %v714
          %v716 = vpop.xlane.xlu0 %715
          %v717 = vsel %vm696, %v713, 0.0
          %718 = vadd.xlane.f32.xlu0 %v717
          %v719 = vpop.xlane.xlu0 %718
          %v720 = vadd.f32 %v714, %v717
          %v721 = vrot.slane %v720, 4
          %v722 = vadd.f32 %v720, %v721
          %v723 = vrot.slane %v722, 2
          %v724 = vadd.f32 %v722, %v723
          %v725 = vrot.slane %v724, 1
          %v726 = vadd.f32 %v724, %v725
          %v727 = vmax.f32 %v716, 1e-12
          %v728 = vmax.f32 %v719, 1e-12
          %v729 = vrsqrt.pop %v727
          %v730 = vrsqrt.pop %v728
          %v731 = vmax.f32 %v726, 1e-12
          %v732 = vrsqrt.pop %v731
          %v733 = vmul.f32 %v703, %v729
          %v734 = vmul.f32 %v704, %v730
          %v735 = vmul.f32 %v733, %v732
          %v736 = vmul.f32 %v734, %v732
          %v737 = vmul.f32 %v735, 10.0
          %v738 = vmul.f32 %v736, 10.0
          %v739 = vmul.f32 %v737, 1.442695
          %v740 = vpow.pop %v739
          %v741 = vmul.f32 %v738, 1.442695
          %v742 = vpow.pop %v741
          %v743 = vld [vmem:[#allocation7] sm:$0xff]
          %v745 = vsel %vm696, %v740, 0
          %v748 = vsel %vm696, %v742, 0
          %v751 = vsel %vm696, %v743, 0
          %753 = vmatprep.subr.mxu0 0.0
          %754 = vmatpush1.xpose.msra.mxu0 0.0
          %755 = vmatprep.subr.mxu0 0.0
          %756 = vmatpush1.xpose.msra.mxu0 0.0
          %757 = vmatprep.subr.mxu0 0.0
          %758 = vmatpush1.xpose.msra.mxu0 0.0
          %759 = vmatprep.subr.mxu0 0.0
          %760 = vmatpush1.xpose.msra.mxu0 0.0
          %761 = vmatprep.subr.mxu0 0.0
          %762 = vmatpush1.xpose.msra.mxu0 0.0
          %763 = vmatprep.subr.mxu0 0.0
          %764 = vmatpush1.xpose.msra.mxu0 0.0
          %765 = vmatprep.subr.mxu0 0.0
          %766 = vmatpush1.xpose.msra.mxu0 0.0
          %767 = vmatprep.subr.mxu0 0.0
          %768 = vmatpush1.xpose.msra.mxu0 0.0
          %769 = vmatprep.subr.mxu0 0.0
          %770 = vmatpush1.xpose.msra.mxu0 0.0
          %771 = vmatprep.subr.mxu0 0.0
          %772 = vmatpush1.xpose.msra.mxu0 0.0
          %773 = vmatprep.subr.mxu0 0.0
          %774 = vmatpush1.xpose.msra.mxu0 0.0
          %775 = vmatprep.subr.mxu0 0.0
          %776 = vmatpush1.xpose.msra.mxu0 0.0
          %777 = vmatprep.subr.mxu0 0.0
          %778 = vmatpush1.xpose.msra.mxu0 0.0
          %779 = vmatprep.subr.mxu0 0.0
          %780 = vmatpush1.xpose.msra.mxu0 0.0
          %781 = vmatprep.subr.mxu0 0.0
          %782 = vmatpush1.xpose.msra.mxu0 0.0
          %783 = vmatprep.subr.mxu0 0.0
          %784 = vmatpush1.xpose.msra.mxu0 %v751
          %785 = vmatprep.subr.mxu0 0.0
          %786 = vmatpush2.xpose.msra.mxu0 0.0
          %787 = vmatprep.subr.mxu0 0.0
          %788 = vmatpush2.xpose.msra.mxu0 0.0
          %789 = vmatprep.subr.mxu0 0.0
          %790 = vmatpush2.xpose.msra.mxu0 0.0
          %791 = vmatprep.subr.mxu0 0.0
          %792 = vmatpush2.xpose.msra.mxu0 0.0
          %793 = vmatprep.subr.mxu0 0.0
          %794 = vmatpush2.xpose.msra.mxu0 0.0
          %795 = vmatprep.subr.mxu0 0.0
          %796 = vmatpush2.xpose.msra.mxu0 0.0
          %797 = vmatprep.subr.mxu0 0.0
          %798 = vmatpush2.xpose.msra.mxu0 0.0
          %799 = vmatprep.subr.mxu0 0.0
          %800 = vmatpush2.xpose.msra.mxu0 0.0
          %801 = vmatprep.subr.mxu0 0.0
          %802 = vmatpush2.xpose.msra.mxu0 0.0
          %803 = vmatprep.subr.mxu0 0.0
          %804 = vmatpush2.xpose.msra.mxu0 0.0
          %805 = vmatprep.subr.mxu0 0.0
          %806 = vmatpush2.xpose.msra.mxu0 0.0
          %807 = vmatprep.subr.mxu0 0.0
          %808 = vmatpush2.xpose.msra.mxu0 0.0
          %809 = vmatprep.subr.mxu0 0.0
          %810 = vmatpush2.xpose.msra.mxu0 0.0
          %811 = vmatprep.subr.mxu0 0.0
          %812 = vmatpush2.xpose.msra.mxu0 0.0
          %813 = vmatprep.subr.mxu0 0.0
          %814 = vmatpush2.xpose.msra.mxu0 0.0
          %815 = vmatprep.subr.mxu0 0.0
          %816 = vmatpush2.xpose.msra.mxu0 0.0
          %817 = vmatprep.mubr.f32.mxu0 0.0
          %818 = vmatmul.mubr.f32.gmra.mxu0 %v745
          %v819 = vpop.f32.mrf.mxu0
          %v820 = vadd.f32 0.0, %v819
          %v821 = vpop.f32.mrf.mxu0
          %822 = vmatprep.mubr.f32.mxu0 0.0
          %823 = vmatmul.mubr.f32.gmra.mxu0 %v748
          %v824 = vpop.f32.mrf.mxu0
          %v825 = vadd.f32 0.0, %v824
          %v826 = vpop.f32.mrf.mxu0
          %827 = vdwg.mxu0
          %v828 = vld [vmem:[%s4] sm:$0xff]
          %v829 = vld [vmem:[%s4 + $0x8] sm:$0xff]
          %v830 = vld [vmem:[%s4 + $0x10] sm:$0xff]
          %v831 = vld [vmem:[%s4 + $0x18] sm:$0xff]
          %v832 = vld [vmem:[%s5] sm:$0xff]
          %v833 = vld [vmem:[%s5 + $0x8] sm:$0xff]
          %v834 = vld [vmem:[%s5 + $0x10] sm:$0xff]
          %v835 = vld [vmem:[%s5 + $0x18] sm:$0xff]
          %v836 = vld [vmem:[%s6] sm:$0xff]
          %v837 = vld [vmem:[%s6 + $0x8] sm:$0xff]
          %v838 = vld [vmem:[%s6 + $0x10] sm:$0xff]
          %v839 = vld [vmem:[%s6 + $0x18] sm:$0xff]
          %v841 = vsel %vm696, %v828, 0
          %v844 = vsel %vm696, %v829, 0
          %v847 = vsel %vm696, %v830, 0
          %v850 = vsel %vm696, %v831, 0
          %852 = vmatprep.subr.mxu0 0.0
          %853 = vmatpush1.msra.mxu0 0.0
          %854 = vmatprep.subr.mxu0 0.0
          %855 = vmatpush1.msra.mxu0 0.0
          %856 = vmatprep.subr.mxu0 0.0
          %857 = vmatpush1.msra.mxu0 0.0
          %858 = vmatprep.subr.mxu0 0.0
          %859 = vmatpush1.msra.mxu0 0.0
          %860 = vmatprep.subr.mxu0 0.0
          %861 = vmatpush1.msra.mxu0 0.0
          %862 = vmatprep.subr.mxu0 0.0
          %863 = vmatpush1.msra.mxu0 0.0
          %864 = vmatprep.subr.mxu0 0.0
          %865 = vmatpush1.msra.mxu0 0.0
          %866 = vmatprep.subr.mxu0 0.0
          %867 = vmatpush1.msra.mxu0 0.0
          %868 = vmatprep.subr.mxu0 0.0
          %869 = vmatpush1.msra.mxu0 0.0
          %870 = vmatprep.subr.mxu0 0.0
          %871 = vmatpush1.msra.mxu0 0.0
          %872 = vmatprep.subr.mxu0 0.0
          %873 = vmatpush1.msra.mxu0 0.0
          %874 = vmatprep.subr.mxu0 0.0
          %875 = vmatpush1.msra.mxu0 0.0
          %876 = vmatprep.subr.mxu0 0.0
          %877 = vmatpush1.msra.mxu0 0.0
          %878 = vmatprep.subr.mxu0 0.0
          %879 = vmatpush1.msra.mxu0 0.0
          %880 = vmatprep.subr.mxu0 0.0
          %881 = vmatpush1.msra.mxu0 %v738
          %882 = vmatprep.subr.mxu0 0.0
          %883 = vmatpush1.msra.mxu0 %v737
          %884 = vmatprep.subr.mxu0 0.0
          %885 = vmatpush2.msra.mxu0 0.0
          %886 = vmatprep.subr.mxu0 0.0
          %887 = vmatpush2.msra.mxu0 0.0
          %888 = vmatprep.subr.mxu0 0.0
          %889 = vmatpush2.msra.mxu0 0.0
          %890 = vmatprep.subr.mxu0 0.0
          %891 = vmatpush2.msra.mxu0 0.0
          %892 = vmatprep.subr.mxu0 0.0
          %893 = vmatpush2.msra.mxu0 0.0
          %894 = vmatprep.subr.mxu0 0.0
          %895 = vmatpush2.msra.mxu0 0.0
          %896 = vmatprep.subr.mxu0 0.0
          %897 = vmatpush2.msra.mxu0 0.0
          %898 = vmatprep.subr.mxu0 0.0
          %899 = vmatpush2.msra.mxu0 0.0
          %900 = vmatprep.subr.mxu0 0.0
          %901 = vmatpush2.msra.mxu0 0.0
          %902 = vmatprep.subr.mxu0 0.0
          %903 = vmatpush2.msra.mxu0 0.0
          %904 = vmatprep.subr.mxu0 0.0
          %905 = vmatpush2.msra.mxu0 0.0
          %906 = vmatprep.subr.mxu0 0.0
          %907 = vmatpush2.msra.mxu0 0.0
          %908 = vmatprep.subr.mxu0 0.0
          %909 = vmatpush2.msra.mxu0 0.0
          %910 = vmatprep.subr.mxu0 0.0
          %911 = vmatpush2.msra.mxu0 0.0
          %912 = vmatprep.subr.mxu0 0.0
          %913 = vmatpush2.msra.mxu0 0.0
          %914 = vmatprep.subr.mxu0 0.0
          %915 = vmatpush2.msra.mxu0 0.0
          %916 = vmatprep.mubr.f32.mxu0 0.0
          %917 = vmatmul.mubr.f32.gmra.mxu0 %v841
          %v918 = vpop.f32.mrf.mxu0
          %v919 = vadd.f32 0.0, %v918
          %v920 = vpop.f32.mrf.mxu0
          %921 = vmatprep.mubr.f32.mxu0 0.0
          %922 = vmatmul.mubr.f32.gmra.mxu0 %v844
          %v923 = vpop.f32.mrf.mxu0
          %v924 = vadd.f32 0.0, %v923
          %v925 = vpop.f32.mrf.mxu0
          %926 = vmatprep.mubr.f32.mxu0 0.0
          %927 = vmatmul.mubr.f32.gmra.mxu0 %v847
          %v928 = vpop.f32.mrf.mxu0
          %v929 = vadd.f32 0.0, %v928
          %v930 = vpop.f32.mrf.mxu0
          %931 = vmatprep.mubr.f32.mxu0 0.0
          %932 = vmatmul.mubr.f32.gmra.mxu0 %v850
          %v933 = vpop.f32.mrf.mxu0
          %v934 = vadd.f32 0.0, %v933
          %v935 = vpop.f32.mrf.mxu0
          %936 = vdwg.mxu0
          %v937 = vmul.f32 %v919, %v832
          %v938 = vmul.f32 %v924, %v833
          %v939 = vmul.f32 %v929, %v834
          %v940 = vmul.f32 %v934, %v835
          %v941 = vsel %vm696, %v937, 0.0
          %942 = vadd.xlane.f32.xlu0 %v941
          %v943 = vpop.xlane.xlu0 %942
          %v944 = vsel %vm696, %v938, 0.0
          %945 = vadd.xlane.f32.xlu0 %v944
          %v946 = vpop.xlane.xlu0 %945
          %v947 = vsel %vm696, %v939, 0.0
          %948 = vadd.xlane.f32.xlu0 %v947
          %v949 = vpop.xlane.xlu0 %948
          %v950 = vsel %vm696, %v940, 0.0
          %951 = vadd.xlane.f32.xlu0 %v950
          %v952 = vpop.xlane.xlu0 %951
          %953 = vmatprep.subr.mxu0 0.0
          %954 = vmatpush1.msra.mxu0 0.0
          %955 = vmatprep.subr.mxu0 0.0
          %956 = vmatpush1.msra.mxu0 0.0
          %957 = vmatprep.subr.mxu0 0.0
          %958 = vmatpush1.msra.mxu0 0.0
          %959 = vmatprep.subr.mxu0 0.0
          %960 = vmatpush1.msra.mxu0 0.0
          %961 = vmatprep.subr.mxu0 0.0
          %962 = vmatpush1.msra.mxu0 0.0
          %963 = vmatprep.subr.mxu0 0.0
          %964 = vmatpush1.msra.mxu0 0.0
          %965 = vmatprep.subr.mxu0 0.0
          %966 = vmatpush1.msra.mxu0 0.0
          %967 = vmatprep.subr.mxu0 0.0
          %968 = vmatpush1.msra.mxu0 0.0
          %969 = vmatprep.subr.mxu0 0.0
          %970 = vmatpush1.msra.mxu0 0.0
          %971 = vmatprep.subr.mxu0 0.0
          %972 = vmatpush1.msra.mxu0 0.0
          %973 = vmatprep.subr.mxu0 0.0
          %974 = vmatpush1.msra.mxu0 0.0
          %975 = vmatprep.subr.mxu0 0.0
          %976 = vmatpush1.msra.mxu0 0.0
          %977 = vmatprep.subr.mxu0 0.0
          %978 = vmatpush1.msra.mxu0 0.0
          %979 = vmatprep.subr.mxu0 0.0
          %980 = vmatpush1.msra.mxu0 0.0
          %981 = vmatprep.subr.mxu0 0.0
          %982 = vmatpush1.msra.mxu0 %v825
          %983 = vmatprep.subr.mxu0 0.0
          %984 = vmatpush1.msra.mxu0 %v820
          %985 = vmatprep.subr.mxu0 0.0
          %986 = vmatpush2.msra.mxu0 0.0
          %987 = vmatprep.subr.mxu0 0.0
          %988 = vmatpush2.msra.mxu0 0.0
          %989 = vmatprep.subr.mxu0 0.0
          %990 = vmatpush2.msra.mxu0 0.0
          %991 = vmatprep.subr.mxu0 0.0
          %992 = vmatpush2.msra.mxu0 0.0
          %993 = vmatprep.subr.mxu0 0.0
          %994 = vmatpush2.msra.mxu0 0.0
          %995 = vmatprep.subr.mxu0 0.0
          %996 = vmatpush2.msra.mxu0 0.0
          %997 = vmatprep.subr.mxu0 0.0
          %998 = vmatpush2.msra.mxu0 0.0
          %999 = vmatprep.subr.mxu0 0.0
          %1000 = vmatpush2.msra.mxu0 0.0
          %1001 = vmatprep.subr.mxu0 0.0
          %1002 = vmatpush2.msra.mxu0 0.0
          %1003 = vmatprep.subr.mxu0 0.0
          %1004 = vmatpush2.msra.mxu0 0.0
          %1005 = vmatprep.subr.mxu0 0.0
          %1006 = vmatpush2.msra.mxu0 0.0
          %1007 = vmatprep.subr.mxu0 0.0
          %1008 = vmatpush2.msra.mxu0 0.0
          %1009 = vmatprep.subr.mxu0 0.0
          %1010 = vmatpush2.msra.mxu0 0.0
          %1011 = vmatprep.subr.mxu0 0.0
          %1012 = vmatpush2.msra.mxu0 0.0
          %1013 = vmatprep.subr.mxu0 0.0
          %1014 = vmatpush2.msra.mxu0 0.0
          %1015 = vmatprep.subr.mxu0 0.0
          %1016 = vmatpush2.msra.mxu0 0.0
          %1017 = vmatprep.mubr.f32.mxu0 0.0
          %1018 = vmatmul.mubr.f32.gmra.mxu0 %v841
          %v1019 = vpop.f32.mrf.mxu0
          %v1020 = vadd.f32 0.0, %v1019
          %v1021 = vpop.f32.mrf.mxu0
          %1022 = vmatprep.mubr.f32.mxu0 0.0
          %1023 = vmatmul.mubr.f32.gmra.mxu0 %v844
          %v1024 = vpop.f32.mrf.mxu0
          %v1025 = vadd.f32 0.0, %v1024
          %v1026 = vpop.f32.mrf.mxu0
          %1027 = vmatprep.mubr.f32.mxu0 0.0
          %1028 = vmatmul.mubr.f32.gmra.mxu0 %v847
          %v1029 = vpop.f32.mrf.mxu0
          %v1030 = vadd.f32 0.0, %v1029
          %v1031 = vpop.f32.mrf.mxu0
          %1032 = vmatprep.mubr.f32.mxu0 0.0
          %1033 = vmatmul.mubr.f32.gmra.mxu0 %v850
          %v1034 = vpop.f32.mrf.mxu0
          %v1035 = vadd.f32 0.0, %v1034
          %v1036 = vpop.f32.mrf.mxu0
          %1037 = vdwg.mxu0
          %v1038 = vmul.f32 %v1020, %v836
          %v1039 = vmul.f32 %v1025, %v837
          %v1040 = vmul.f32 %v1030, %v838
          %v1041 = vmul.f32 %v1035, %v839
          %v1042 = vsel %vm365, %v1038, 0.0
          %1043 = vadd.xlane.f32.xlu0 %v1042
          %v1044 = vpop.xlane.xlu0 %1043
          %v1045 = vsel %vm365, %v1039, 0.0
          %1046 = vadd.xlane.f32.xlu0 %v1045
          %v1047 = vpop.xlane.xlu0 %1046
          %v1048 = vsel %vm365, %v1040, 0.0
          %1049 = vadd.xlane.f32.xlu0 %v1048
          %v1050 = vpop.xlane.xlu0 %1049
          %v1051 = vsel %vm365, %v1041, 0.0
          %1052 = vadd.xlane.f32.xlu0 %v1051
          %v1053 = vpop.xlane.xlu0 %1052
          %v1055 = vsel %vm696, %v832, 0
          %v1058 = vsel %vm696, %v833, 0
          %v1061 = vsel %vm696, %v834, 0
          %v1064 = vsel %vm696, %v835, 0
          %1066 = vmatprep.subr.mxu0 0.0
          %1067 = vmatpush1.msra.mxu0 0.0
          %1068 = vmatprep.subr.mxu0 0.0
          %1069 = vmatpush1.msra.mxu0 0.0
          %1070 = vmatprep.subr.mxu0 0.0
          %1071 = vmatpush1.msra.mxu0 0.0
          %1072 = vmatprep.subr.mxu0 0.0
          %1073 = vmatpush1.msra.mxu0 0.0
          %1074 = vmatprep.subr.mxu0 0.0
          %1075 = vmatpush1.msra.mxu0 0.0
          %1076 = vmatprep.subr.mxu0 0.0
          %1077 = vmatpush1.msra.mxu0 0.0
          %1078 = vmatprep.subr.mxu0 0.0
          %1079 = vmatpush1.msra.mxu0 0.0
          %1080 = vmatprep.subr.mxu0 0.0
          %1081 = vmatpush1.msra.mxu0 0.0
          %1082 = vmatprep.subr.mxu0 0.0
          %1083 = vmatpush1.msra.mxu0 0.0
          %1084 = vmatprep.subr.mxu0 0.0
          %1085 = vmatpush1.msra.mxu0 0.0
          %1086 = vmatprep.subr.mxu0 0.0
          %1087 = vmatpush1.msra.mxu0 0.0
          %1088 = vmatprep.subr.mxu0 0.0
          %1089 = vmatpush1.msra.mxu0 0.0
          %1090 = vmatprep.subr.mxu0 0.0
          %1091 = vmatpush1.msra.mxu0 0.0
          %1092 = vmatprep.subr.mxu0 0.0
          %1093 = vmatpush1.msra.mxu0 0.0
          %1094 = vmatprep.subr.mxu0 0.0
          %1095 = vmatpush1.msra.mxu0 %v825
          %1096 = vmatprep.subr.mxu0 0.0
          %1097 = vmatpush1.msra.mxu0 %v820
          %1098 = vmatprep.subr.mxu0 0.0
          %1099 = vmatpush2.msra.mxu0 0.0
          %1100 = vmatprep.subr.mxu0 0.0
          %1101 = vmatpush2.msra.mxu0 0.0
          %1102 = vmatprep.subr.mxu0 0.0
          %1103 = vmatpush2.msra.mxu0 0.0
          %1104 = vmatprep.subr.mxu0 0.0
          %1105 = vmatpush2.msra.mxu0 0.0
          %1106 = vmatprep.subr.mxu0 0.0
          %1107 = vmatpush2.msra.mxu0 0.0
          %1108 = vmatprep.subr.mxu0 0.0
          %1109 = vmatpush2.msra.mxu0 0.0
          %1110 = vmatprep.subr.mxu0 0.0
          %1111 = vmatpush2.msra.mxu0 0.0
          %1112 = vmatprep.subr.mxu0 0.0
          %1113 = vmatpush2.msra.mxu0 0.0
          %1114 = vmatprep.subr.mxu0 0.0
          %1115 = vmatpush2.msra.mxu0 0.0
          %1116 = vmatprep.subr.mxu0 0.0
          %1117 = vmatpush2.msra.mxu0 0.0
          %1118 = vmatprep.subr.mxu0 0.0
          %1119 = vmatpush2.msra.mxu0 0.0
          %1120 = vmatprep.subr.mxu0 0.0
          %1121 = vmatpush2.msra.mxu0 0.0
          %1122 = vmatprep.subr.mxu0 0.0
          %1123 = vmatpush2.msra.mxu0 0.0
          %1124 = vmatprep.subr.mxu0 0.0
          %1125 = vmatpush2.msra.mxu0 0.0
          %1126 = vmatprep.subr.mxu0 0.0
          %1127 = vmatpush2.msra.mxu0 0.0
          %1128 = vmatprep.subr.mxu0 0.0
          %1129 = vmatpush2.msra.mxu0 0.0
          %1130 = vmatprep.mubr.f32.mxu0 0.0
          %1131 = vmatmul.mubr.f32.gmra.mxu0 %v1055
          %v1132 = vpop.f32.mrf.mxu0
          %v1133 = vadd.f32 0.0, %v1132
          %v1134 = vpop.f32.mrf.mxu0
          %1135 = vmatprep.mubr.f32.mxu0 0.0
          %1136 = vmatmul.mubr.f32.gmra.mxu0 %v1058
          %v1137 = vpop.f32.mrf.mxu0
          %v1138 = vadd.f32 0.0, %v1137
          %v1139 = vpop.f32.mrf.mxu0
          %1140 = vmatprep.mubr.f32.mxu0 0.0
          %1141 = vmatmul.mubr.f32.gmra.mxu0 %v1061
          %v1142 = vpop.f32.mrf.mxu0
          %v1143 = vadd.f32 0.0, %v1142
          %v1144 = vpop.f32.mrf.mxu0
          %1145 = vmatprep.mubr.f32.mxu0 0.0
          %1146 = vmatmul.mubr.f32.gmra.mxu0 %v1064
          %v1147 = vpop.f32.mrf.mxu0
          %v1148 = vadd.f32 0.0, %v1147
          %v1149 = vpop.f32.mrf.mxu0
          %1150 = vdwg.mxu0
          %v1151 = vmul.f32 %v1133, %v836
          %v1152 = vmul.f32 %v1138, %v837
          %v1153 = vmul.f32 %v1143, %v838
          %v1154 = vmul.f32 %v1148, %v839
          %v1155 = vsel %vm365, %v1151, 0.0
          %1156 = vadd.xlane.f32.xlu0 %v1155
          %v1157 = vpop.xlane.xlu0 %1156
          %v1158 = vsel %vm365, %v1152, 0.0
          %1159 = vadd.xlane.f32.xlu0 %v1158
          %v1160 = vpop.xlane.xlu0 %1159
          %v1161 = vsel %vm365, %v1153, 0.0
          %1162 = vadd.xlane.f32.xlu0 %v1161
          %v1163 = vpop.xlane.xlu0 %1162
          %v1164 = vsel %vm365, %v1154, 0.0
          %1165 = vadd.xlane.f32.xlu0 %v1164
          %v1166 = vpop.xlane.xlu0 %1165
          %v1167 = vmul.f32 %v943, 1.442695
          %v1168 = vpow.pop %v1167
          %v1169 = vmul.f32 %v946, 1.442695
          %v1170 = vpow.pop %v1169
          %v1171 = vmul.f32 %v949, 1.442695
          %v1172 = vpow.pop %v1171
          %v1173 = vmul.f32 %v952, 1.442695
          %v1174 = vpow.pop %v1173
          %v1175 = vadd.f32 %v1168, %v1044
          %v1176 = vadd.f32 %v1170, %v1047
          %v1177 = vadd.f32 %v1172, %v1050
          %v1178 = vadd.f32 %v1174, %v1053
          %v1179 = vlog2.pop %v1175
          %v1180 = vmul.f32 %v1179, 0.6931472
          %v1181 = vlog2.pop %v1176
          %v1182 = vmul.f32 %v1181, 0.6931472
          %v1183 = vlog2.pop %v1177
          %v1184 = vmul.f32 %v1183, 0.6931472
          %v1185 = vlog2.pop %v1178
          %v1186 = vmul.f32 %v1185, 0.6931472
          %v1187 = vadd.f32 %v1168, %v1157
          %v1188 = vadd.f32 %v1170, %v1160
          %v1189 = vadd.f32 %v1172, %v1163
          %v1190 = vadd.f32 %v1174, %v1166
          %v1191 = vlog2.pop %v1187
          %v1192 = vmul.f32 %v1191, 0.6931472
          %v1193 = vlog2.pop %v1188
          %v1194 = vmul.f32 %v1193, 0.6931472
          %v1195 = vlog2.pop %v1189
          %v1196 = vmul.f32 %v1195, 0.6931472
          %v1197 = vlog2.pop %v1190
          %v1198 = vmul.f32 %v1197, 0.6931472
          %v1199 = vadd.f32 %v1180, %v1192
          %v1200 = vadd.f32 %v1182, %v1194
          %v1201 = vadd.f32 %v1184, %v1196
          %v1202 = vadd.f32 %v1186, %v1198
          %v1203 = vmul.f32 %v943, 2.0
          %v1204 = vmul.f32 %v946, 2.0
          %v1205 = vmul.f32 %v949, 2.0
          %v1206 = vmul.f32 %v952, 2.0
          %v1207 = vsub.f32 %v1199, %v1203
          %v1208 = vsub.f32 %v1200, %v1204
          %v1209 = vsub.f32 %v1201, %v1205
          %v1210 = vsub.f32 %v1202, %v1206
          %vm1211 = vcmask 7168
          %v1212 = vsel %vm1211, %v1207, 0.0
          %v1213 = vsel %vm1211, %v1208, 0.0
          %v1214 = vadd.f32 %v1212, %v1213
          %v1215 = vsel %vm1211, %v1209, 0.0
          %v1216 = vadd.f32 %v1214, %v1215
          %v1217 = vsel %vm1211, %v1210, 0.0
          %v1218 = vadd.f32 %v1216, %v1217
          %1219 = vadd.xlane.f32.xlu0 %v1218
          %v1220 = vpop.xlane.xlu0 %1219
          %v1221 = vrot.slane %v1220, 4
          %v1222 = vadd.f32 %v1220, %v1221
          %v1223 = vrot.slane %v1222, 2
          %v1224 = vadd.f32 %v1222, %v1223
          %v1225 = vrot.slane %v1224, 1
          %v1226 = vadd.f32 %v1224, %v1225
          %s1227 = vtos %v1226
          %s1228 = smul.f32 %s1227, 0.041666668
          %v1229 = vstv %s1228
          %v1230 = vadd.f32 %v1229, 0.0
          %1231 = vst [vmem:[#allocation9] sm:$0xff] %v1230
        $region87: #{tpu_custom_call.1} parent=66 // pred_fallthru
          _
        // Predicated region
        $region88: #{tpu_custom_call.1} parent=66 // pred_check
          %p1232 = pneg %p193
        $region89: #{tpu_custom_call.1} parent=66 // pred_check_branch
          %1234 = sbr.rel (%p1232) target = $region91
        $region90: #{tpu_custom_call.1} parent=66 // pred_region
          %s1236 = ssub.s32 128, 128
          %1237 = vsyncadd [#allocation6], %s1236
          %s1239 = sshll.u32 [#allocation9], 4
          %s1240 = int_to_ptr.vmem [resolvable:$true] %s1239
          %1242 = dma.vmem_to_hbm [thread:$0]  %s1240, 128, %s7, [#allocation6]
        $region91: #{tpu_custom_call.1} parent=66 // pred_fallthru
          _
        // Predicated region
        $region92: #{tpu_custom_call.1} parent=66 // pred_check
          %p1243 = pneg %p193
        $region93: #{tpu_custom_call.1} parent=66 // pred_check_branch
          %1245 = sbr.rel (%p1243) target = $region95
        $region94: #{tpu_custom_call.1} parent=66 // pred_region
          %1246 = dma.done [#allocation6], 128
        $region95: #{tpu_custom_call.1} parent=66 // pred_fallthru
          _
      $region67: #{tpu_custom_call.1} parent=5 // pred_fallthru
        _
      %p1247 = scmp.le.s32.totalorder 2, %s18
      // Predicated region
      $region96: #{tpu_custom_call.1} parent=5 // pred_check
        %p1248 = pneg %p1247
      $region97: #{tpu_custom_call.1} parent=5 // pred_check_branch
        %1250 = sbr.rel (%p1248) target = $region99
      $region98: #{tpu_custom_call.1} parent=5 // pred_region
        %s1251 = ssub.s32 %s18, 2
      $region99: #{tpu_custom_call.1} parent=5 // pred_fallthru
        _
    $region6: #{tpu_custom_call.1} parent=1 // loop_footer
      %s22 = sadd.s32 1, %s18
    $region7: #{tpu_custom_call.1} parent=1 // loop_footer_branch
      %17 = sbr.rel target = $region3
    $region8: #{tpu_custom_call.1} parent=1 // loop_exit
      _
    %1252 = vsyncpa [#allocation5], 1
    %s1253 = scalar_lea.sflag [#allocation5], 1
    %1254 = vsyncpa %s1253, 1
    %1255 = vsyncpa [#allocation8], 1
    %1256 = vsyncpa [#allocation6], 1
    %s1257 = scalar_lea.sflag [#allocation6], 1
    %1258 = vsyncpa %s1257, 1

</llo_original>
